<compile_context>
chip_gen: v5e
topology: v5e:2x2
jax: 0.10.0
libtpu: 0.0.40
codegen_flags: <defaults>
</compile_context>

<pallas_src>
import jax
import jax.numpy as jnp
from jax.experimental import pallas as pl
from jax.experimental.pallas import tpu as pltpu

# ----------------------------- model config ---------------------------------
B = 2           # batch
S = 8           # sequence length
BS = B * S      # flattened rows fed to every projection matmul
D = 128         # hidden size (embed_dim)
V = 256         # vocab size
M = 256         # MLP intermediate size
N_LAYERS = 2    # transformer decoder layers
EPS = 1e-6
NEG_INF = -1e30
IGNORE_INDEX = -100


# ----------------------------- fused Pallas kernel ---------------------------
def _fused_lm_kernel(x_ref, bias_ref, tgt_ref,
                     ln1_ref, wqkv_ref, wo_ref,
                     ln2_ref, wgu_ref, wd_ref,
                     lnf_ref, wlm_ref,
                     logits_ref, loss_ref):
    """Single launch: unrolled layer loop on the resident (BS, D) activation
    value, per-batch attention, then final-norm + LM head + shifted CE loss."""

    def rmsnorm(h, w):
        var = jnp.mean(h * h, axis=-1, keepdims=True)
        return h * jax.lax.rsqrt(var + EPS) * w

    def layer_step(l, h):
        # --- RMSNorm 1 (f32 on VPU) ---
        xn = rmsnorm(h, ln1_ref[l]).astype(jnp.bfloat16)

        # --- fused QKV projection: one (BS, D) x (D, 3D) MXU issue ---
        qkv = jnp.dot(xn, wqkv_ref[l], preferred_element_type=jnp.float32)
        q = qkv[:, :D]          # 1/sqrt(D) scale already folded into W_q
        k = qkv[:, D:2 * D]
        v = qkv[:, 2 * D:]
        # TODO(synk): rotary position embeddings omitted in this synthetic backbone.

        # --- per-batch causal self-attention (head_dim == D) ---
        attn_parts = []
        for b in range(B):                       # static unroll, B=2
            r = slice(b * S, (b + 1) * S)
            scores = jax.lax.dot_general(        # NT contraction: no k relayout
                q[r], k[r], (((1,), (1,)), ((), ())),
                preferred_element_type=jnp.float32)          # (S, S)
            scores = scores + bias_ref[b]        # causal + key padding, per batch
            p = jnp.exp(scores - jnp.max(scores, axis=-1, keepdims=True))
            p = p / jnp.sum(p, axis=-1, keepdims=True)       # exact softmax
            attn_parts.append(jnp.dot(p, v[r], preferred_element_type=jnp.float32))
        attn = jnp.concatenate(attn_parts, axis=0)           # (BS, D)

        h1 = h + jnp.dot(attn.astype(jnp.bfloat16), wo_ref[l],
                         preferred_element_type=jnp.float32)

        # --- RMSNorm 2 + SwiGLU MLP (fused gate/up projection) ---
        hn = rmsnorm(h1, ln2_ref[l]).astype(jnp.bfloat16)
        gu = jnp.dot(hn, wgu_ref[l], preferred_element_type=jnp.float32)  # (BS, 2M)
        g = gu[:, :M]
        u = gu[:, M:]
        act = g * jax.nn.sigmoid(g) * u
        return h1 + jnp.dot(act.astype(jnp.bfloat16), wd_ref[l],
                            preferred_element_type=jnp.float32)

    h = jax.lax.fori_loop(0, N_LAYERS, layer_step, x_ref[...], unroll=True)

    # --- final RMSNorm + LM head + shifted cross-entropy (cold epilogue) ---
    hfn = rmsnorm(h, lnf_ref[...]).astype(jnp.bfloat16)
    logits = jnp.dot(hfn, wlm_ref[...], preferred_element_type=jnp.float32)  # (BS, V)
    logits_ref[...] = logits

    m = jnp.max(logits, axis=-1, keepdims=True)
    lse = m + jnp.log(jnp.sum(jnp.exp(logits - m), axis=-1, keepdims=True))
    tgt = tgt_ref[...]                            # (BS, 1) int32; lane-sparse but
    valid = tgt != IGNORE_INDEX                   # read exactly once on a cold path
    onehot = tgt == jax.lax.broadcasted_iota(jnp.int32, (BS, V), 1)
    picked = jnp.sum(jnp.where(onehot, logits, 0.0), axis=-1, keepdims=True)
    nll = lse - picked                            # (BS, 1)
    loss_sum = jnp.sum(jnp.where(valid, nll, 0.0))
    count = jnp.sum(valid.astype(jnp.float32))
    loss_ref[0, 0] = loss_sum / jnp.maximum(count, 1.0)      # count==0 NaN guard


# ----------------------------- Pallas wrapper --------------------------------
def fused_forward(x_flat, bias, targets, params):
    logits, loss = pl.pallas_call(
        _fused_lm_kernel,
        out_shape=(jax.ShapeDtypeStruct((BS, V), jnp.float32),
                   jax.ShapeDtypeStruct((1, 1), jnp.float32)),
        # grid=() (single invocation): whole arrays are resident VMEM blocks.
        out_specs=(pl.BlockSpec(memory_space=pltpu.MemorySpace.VMEM),   # logits
                   pl.BlockSpec(memory_space=pltpu.MemorySpace.SMEM)),  # scalar loss
    )(x_flat, bias, targets,
      params["ln1"], params["wqkv"], params["wo"],
      params["ln2"], params["wgu"], params["wd"],
      params["final_norm"], params["lm_head"])
    return logits, loss


# ----------------------------- helpers ---------------------------------------
def build_attn_bias(attention_mask):
    """(B, S) {0,1} -> (B, S, S) additive bias: 0 where attend, -1e30 otherwise.
    Per-batch causal + key-padding; the kernel applies it per batch element."""
    s = jnp.arange(S, dtype=jnp.int32)
    causal = s[:, None] >= s[None, :]                       # (S, S)
    key_ok = attention_mask > 0                             # (B, S)
    allow = causal[None, :, :] & key_ok[:, None, :]         # (B, S, S)
    return jnp.where(allow, 0.0, NEG_INF).astype(jnp.float32)


def init_params(key):
    k_embed, k_lm, k_qkv, k_o, k_gu, k_d = jax.random.split(key, 6)
    wqkv = jax.random.normal(k_qkv, (N_LAYERS, D, 3 * D)) * D ** -0.5
    # Fold the 1/sqrt(D) attention scale into W_q (columns [:D]) once, in f32.
    wqkv = wqkv.at[:, :, :D].multiply(D ** -0.5)
    return {
        "embed": (jax.random.normal(k_embed, (V, D)) * 0.02).astype(jnp.float32),
        "lm_head": (jax.random.normal(k_lm, (D, V)) * 0.02).astype(jnp.bfloat16),
        "final_norm": jnp.ones((1, D), jnp.float32),
        "ln1": jnp.ones((N_LAYERS, 1, D), jnp.float32),
        "ln2": jnp.ones((N_LAYERS, 1, D), jnp.float32),
        "wqkv": wqkv.astype(jnp.bfloat16),                                   # (L, D, 3D)
        "wo": (jax.random.normal(k_o, (N_LAYERS, D, D)) * D ** -0.5).astype(jnp.bfloat16),
        "wgu": (jax.random.normal(k_gu, (N_LAYERS, D, 2 * M)) * D ** -0.5).astype(jnp.bfloat16),
        "wd": (jax.random.normal(k_d, (N_LAYERS, M, D)) * M ** -0.5).astype(jnp.bfloat16),
    }


# ----------------------------- backbone class --------------------------------
class PallasLLMBackbone:
    """Concrete synthetic LLMBackbone: tiny causal LM, forward returns CE loss."""

    def __init__(self, llm_backbone_id="pallas-tiny-llama", key=None):
        self.identifier = llm_backbone_id
        self.params = init_params(key if key is not None else jax.random.PRNGKey(0))

    @property
    def embed_dim(self):
        return D

    @property
    def pad_token_id(self):
        return 0

    def embed_input_ids(self, input_ids):
        # Embedding gather is glue; hot-path compute lives in the fused Pallas kernel.
        return jnp.take(self.params["embed"], input_ids, axis=0)

    def forward(self, input_ids=None, attention_mask=None, labels=None,
                inputs_embeds=None):
        if inputs_embeds is None:
            inputs_embeds = self.embed_input_ids(input_ids)
        if attention_mask is None:
            attention_mask = jnp.ones((B, S), jnp.float32)

        bias = build_attn_bias(attention_mask.astype(jnp.float32))

        # HF causal-LM label shift: position t predicts labels[t+1]; last = ignore.
        targets = jnp.concatenate(
            [labels[:, 1:], jnp.full((labels.shape[0], 1), IGNORE_INDEX, labels.dtype)],
            axis=1,
        ).astype(jnp.int32).reshape(BS, 1)

        x_flat = inputs_embeds.astype(jnp.float32).reshape(BS, D)
        logits_flat, loss = fused_forward(x_flat, bias, targets, self.params)
        return {"loss": loss[0, 0], "logits": logits_flat.reshape(B, S, V)}

    # TODO(synk): tokenizer / FSDP wrap policy / gradient checkpointing /
    # prompt_builder_fn / past_key_values caching have no Pallas equivalent
    # (framework plumbing).


# ----------------------------- demo ------------------------------------------
if __name__ == "__main__":
    key = jax.random.PRNGKey(0)
    k_ids, k_params = jax.random.split(key)
    input_ids = jax.random.randint(k_ids, (B, S), 0, V, dtype=jnp.int32)
    attention_mask = jnp.ones((B, S), jnp.float32)
    labels = input_ids  # standard next-token LM targets

    backbone = PallasLLMBackbone(key=k_params)
    out = backbone.forward(input_ids=input_ids,
                           attention_mask=attention_mask,
                           labels=labels)
    jax.block_until_ready(out["loss"])
    jax.block_until_ready(out["logits"])
    assert out["logits"].shape == (B, S, V)
    assert out["loss"].shape == ()
    assert bool(jnp.isfinite(out["loss"]))
    print("KERNEL_OK")
</pallas_src>

<mosaic_0001>
module attributes {stable_mosaic.version = 11 : i64} {
  func.func @_fused_lm_kernel(%arg0: memref<16x128xf32, #tpu.memory_space<vmem>>, %arg1: memref<2x8x8xf32, #tpu.memory_space<vmem>>, %arg2: memref<16x1xi32, #tpu.memory_space<vmem>>, %arg3: memref<2x1x128xf32, #tpu.memory_space<vmem>>, %arg4: memref<2x128x384xbf16, #tpu.memory_space<vmem>>, %arg5: memref<2x128x128xbf16, #tpu.memory_space<vmem>>, %arg6: memref<2x1x128xf32, #tpu.memory_space<vmem>>, %arg7: memref<2x128x512xbf16, #tpu.memory_space<vmem>>, %arg8: memref<2x256x128xbf16, #tpu.memory_space<vmem>>, %arg9: memref<1x128xf32, #tpu.memory_space<vmem>>, %arg10: memref<128x256xbf16, #tpu.memory_space<vmem>>, %arg11: memref<16x256xf32, #tpu.memory_space<vmem>>, %arg12: memref<1x1xf32, #tpu.memory_space<smem>>) attributes {dimension_semantics = [], scalar_prefetch = 0 : i64, scratch_operands = 0 : i64, tpu.core_type = #tpu.core_type<tc>} {
    %c0 = arith.constant 0 : index
    %c0_0 = arith.constant 0 : index
    %0 = vector.load %arg0[%c0, %c0_0] : memref<16x128xf32, #tpu.memory_space<vmem>>, vector<16x128xf32>
    %c0_i32 = arith.constant 0 : i32
    %1 = arith.index_cast %c0_i32 : i32 to index
    %c0_1 = arith.constant 0 : index
    %c0_2 = arith.constant 0 : index
    %2 = vector.load %arg3[%1, %c0_1, %c0_2] : memref<2x1x128xf32, #tpu.memory_space<vmem>>, vector<1x1x128xf32>
    %3 = vector.shape_cast %2 : vector<1x1x128xf32> to vector<1x128xf32>
    %4 = arith.mulf %0, %0 : vector<16x128xf32>
    %cst = arith.constant dense<0.000000e+00> : vector<16xf32>
    %5 = vector.multi_reduction <add>, %4, %cst [1] : vector<16x128xf32> to vector<16xf32>
    %6 = vector.shape_cast %5 : vector<16xf32> to vector<16x1xf32>
    %cst_3 = arith.constant 1.280000e+02 : f32
    %7 = vector.broadcast %cst_3 : f32 to vector<16x1xf32>
    %8 = arith.divf %6, %7 : vector<16x1xf32>
    %cst_4 = arith.constant 9.99999997E-7 : f32
    %9 = vector.broadcast %cst_4 : f32 to vector<16x1xf32>
    %10 = arith.addf %8, %9 : vector<16x1xf32>
    %11 = math.rsqrt %10 : vector<16x1xf32>
    %12 = vector.broadcast %11 : vector<16x1xf32> to vector<16x128xf32>
    %13 = arith.mulf %0, %12 : vector<16x128xf32>
    %14 = vector.broadcast %3 : vector<1x128xf32> to vector<16x128xf32>
    %15 = arith.mulf %13, %14 : vector<16x128xf32>
    %16 = arith.truncf %15 : vector<16x128xf32> to vector<16x128xbf16>
    %17 = arith.index_cast %c0_i32 : i32 to index
    %c0_5 = arith.constant 0 : index
    %c0_6 = arith.constant 0 : index
    %18 = vector.load %arg4[%17, %c0_5, %c0_6] : memref<2x128x384xbf16, #tpu.memory_space<vmem>>, vector<1x128x384xbf16>
    %19 = vector.shape_cast %18 : vector<1x128x384xbf16> to vector<128x384xbf16>
    %cst_7 = arith.constant dense<0.000000e+00> : vector<16x384xf32>
    %20 = tpu.matmul %16, %19, %cst_7 {dimension_numbers = #tpu.dot_dimension_numbers<[1], [0], [0], [1], [0, 0, 1, 1], [], []>} : vector<16x128xbf16>, vector<128x384xbf16>, vector<16x384xf32> -> vector<16x384xf32>
    %21 = vector.extract_strided_slice %20 {offsets = [0, 0], sizes = [16, 128], strides = [1, 1]} : vector<16x384xf32> to vector<16x128xf32>
    %22 = vector.extract_strided_slice %20 {offsets = [0, 128], sizes = [16, 128], strides = [1, 1]} : vector<16x384xf32> to vector<16x128xf32>
    %23 = vector.extract_strided_slice %20 {offsets = [0, 256], sizes = [16, 128], strides = [1, 1]} : vector<16x384xf32> to vector<16x128xf32>
    %24 = vector.extract_strided_slice %21 {offsets = [0, 0], sizes = [8, 128], strides = [1, 1]} : vector<16x128xf32> to vector<8x128xf32>
    %25 = vector.extract_strided_slice %22 {offsets = [0, 0], sizes = [8, 128], strides = [1, 1]} : vector<16x128xf32> to vector<8x128xf32>
    %cst_8 = arith.constant dense<0.000000e+00> : vector<8x8xf32>
    %26 = tpu.matmul %24, %25, %cst_8 {dimension_numbers = #tpu.dot_dimension_numbers<[1], [1], [0], [0], [0, 0, 1, 0], [], []>} : vector<8x128xf32>, vector<8x128xf32>, vector<8x8xf32> -> vector<8x8xf32>
    %c0_9 = arith.constant 0 : index
    %c0_10 = arith.constant 0 : index
    %c0_11 = arith.constant 0 : index
    %27 = vector.load %arg1[%c0_9, %c0_10, %c0_11] : memref<2x8x8xf32, #tpu.memory_space<vmem>>, vector<1x8x8xf32>
    %28 = vector.shape_cast %27 : vector<1x8x8xf32> to vector<8x8xf32>
    %29 = arith.addf %26, %28 : vector<8x8xf32>
    %cst_12 = arith.constant dense<0xFF800000> : vector<8xf32>
    %30 = vector.multi_reduction <maximumf>, %29, %cst_12 [1] : vector<8x8xf32> to vector<8xf32>
    %31 = vector.shape_cast %30 : vector<8xf32> to vector<8x1xf32>
    %32 = vector.broadcast %31 : vector<8x1xf32> to vector<8x8xf32>
    %33 = arith.subf %29, %32 : vector<8x8xf32>
    %34 = math.exp %33 : vector<8x8xf32>
    %cst_13 = arith.constant dense<0.000000e+00> : vector<8xf32>
    %35 = vector.multi_reduction <add>, %34, %cst_13 [1] : vector<8x8xf32> to vector<8xf32>
    %36 = vector.shape_cast %35 : vector<8xf32> to vector<8x1xf32>
    %37 = vector.broadcast %36 : vector<8x1xf32> to vector<8x8xf32>
    %38 = arith.divf %34, %37 : vector<8x8xf32>
    %39 = vector.extract_strided_slice %23 {offsets = [0, 0], sizes = [8, 128], strides = [1, 1]} : vector<16x128xf32> to vector<8x128xf32>
    %cst_14 = arith.constant dense<0.000000e+00> : vector<8x128xf32>
    %40 = tpu.matmul %38, %39, %cst_14 {dimension_numbers = #tpu.dot_dimension_numbers<[1], [0], [0], [1], [0, 0, 1, 1], [], []>} : vector<8x8xf32>, vector<8x128xf32>, vector<8x128xf32> -> vector<8x128xf32>
    %41 = vector.extract_strided_slice %21 {offsets = [8, 0], sizes = [8, 128], strides = [1, 1]} : vector<16x128xf32> to vector<8x128xf32>
    %42 = vector.extract_strided_slice %22 {offsets = [8, 0], sizes = [8, 128], strides = [1, 1]} : vector<16x128xf32> to vector<8x128xf32>
    %cst_15 = arith.constant dense<0.000000e+00> : vector<8x8xf32>
    %43 = tpu.matmul %41, %42, %cst_15 {dimension_numbers = #tpu.dot_dimension_numbers<[1], [1], [0], [0], [0, 0, 1, 0], [], []>} : vector<8x128xf32>, vector<8x128xf32>, vector<8x8xf32> -> vector<8x8xf32>
    %c1 = arith.constant 1 : index
    %c0_16 = arith.constant 0 : index
    %c0_17 = arith.constant 0 : index
    %44 = vector.load %arg1[%c1, %c0_16, %c0_17] : memref<2x8x8xf32, #tpu.memory_space<vmem>>, vector<1x8x8xf32>
    %45 = vector.shape_cast %44 : vector<1x8x8xf32> to vector<8x8xf32>
    %46 = arith.addf %43, %45 : vector<8x8xf32>
    %cst_18 = arith.constant dense<0xFF800000> : vector<8xf32>
    %47 = vector.multi_reduction <maximumf>, %46, %cst_18 [1] : vector<8x8xf32> to vector<8xf32>
    %48 = vector.shape_cast %47 : vector<8xf32> to vector<8x1xf32>
    %49 = vector.broadcast %48 : vector<8x1xf32> to vector<8x8xf32>
    %50 = arith.subf %46, %49 : vector<8x8xf32>
    %51 = math.exp %50 : vector<8x8xf32>
    %cst_19 = arith.constant dense<0.000000e+00> : vector<8xf32>
    %52 = vector.multi_reduction <add>, %51, %cst_19 [1] : vector<8x8xf32> to vector<8xf32>
    %53 = vector.shape_cast %52 : vector<8xf32> to vector<8x1xf32>
    %54 = vector.broadcast %53 : vector<8x1xf32> to vector<8x8xf32>
    %55 = arith.divf %51, %54 : vector<8x8xf32>
    %56 = vector.extract_strided_slice %23 {offsets = [8, 0], sizes = [8, 128], strides = [1, 1]} : vector<16x128xf32> to vector<8x128xf32>
    %cst_20 = arith.constant dense<0.000000e+00> : vector<8x128xf32>
    %57 = tpu.matmul %55, %56, %cst_20 {dimension_numbers = #tpu.dot_dimension_numbers<[1], [0], [0], [1], [0, 0, 1, 1], [], []>} : vector<8x8xf32>, vector<8x128xf32>, vector<8x128xf32> -> vector<8x128xf32>
    %58 = tpu.concatenate %40, %57 in 0 : vector<8x128xf32>, vector<8x128xf32> -> vector<16x128xf32>
    %59 = arith.truncf %58 : vector<16x128xf32> to vector<16x128xbf16>
    %60 = arith.index_cast %c0_i32 : i32 to index
    %c0_21 = arith.constant 0 : index
    %c0_22 = arith.constant 0 : index
    %61 = vector.load %arg5[%60, %c0_21, %c0_22] : memref<2x128x128xbf16, #tpu.memory_space<vmem>>, vector<1x128x128xbf16>
    %62 = vector.shape_cast %61 : vector<1x128x128xbf16> to vector<128x128xbf16>
    %cst_23 = arith.constant dense<0.000000e+00> : vector<16x128xf32>
    %63 = tpu.matmul %59, %62, %cst_23 {dimension_numbers = #tpu.dot_dimension_numbers<[1], [0], [0], [1], [0, 0, 1, 1], [], []>} : vector<16x128xbf16>, vector<128x128xbf16>, vector<16x128xf32> -> vector<16x128xf32>
    %64 = arith.addf %0, %63 : vector<16x128xf32>
    %65 = arith.index_cast %c0_i32 : i32 to index
    %c0_24 = arith.constant 0 : index
    %c0_25 = arith.constant 0 : index
    %66 = vector.load %arg6[%65, %c0_24, %c0_25] : memref<2x1x128xf32, #tpu.memory_space<vmem>>, vector<1x1x128xf32>
    %67 = vector.shape_cast %66 : vector<1x1x128xf32> to vector<1x128xf32>
    %68 = arith.mulf %64, %64 : vector<16x128xf32>
    %cst_26 = arith.constant dense<0.000000e+00> : vector<16xf32>
    %69 = vector.multi_reduction <add>, %68, %cst_26 [1] : vector<16x128xf32> to vector<16xf32>
    %70 = vector.shape_cast %69 : vector<16xf32> to vector<16x1xf32>
    %cst_27 = arith.constant 1.280000e+02 : f32
    %71 = vector.broadcast %cst_27 : f32 to vector<16x1xf32>
    %72 = arith.divf %70, %71 : vector<16x1xf32>
    %cst_28 = arith.constant 9.99999997E-7 : f32
    %73 = vector.broadcast %cst_28 : f32 to vector<16x1xf32>
    %74 = arith.addf %72, %73 : vector<16x1xf32>
    %75 = math.rsqrt %74 : vector<16x1xf32>
    %76 = vector.broadcast %75 : vector<16x1xf32> to vector<16x128xf32>
    %77 = arith.mulf %64, %76 : vector<16x128xf32>
    %78 = vector.broadcast %67 : vector<1x128xf32> to vector<16x128xf32>
    %79 = arith.mulf %77, %78 : vector<16x128xf32>
    %80 = arith.truncf %79 : vector<16x128xf32> to vector<16x128xbf16>
    %81 = arith.index_cast %c0_i32 : i32 to index
    %c0_29 = arith.constant 0 : index
    %c0_30 = arith.constant 0 : index
    %82 = vector.load %arg7[%81, %c0_29, %c0_30] : memref<2x128x512xbf16, #tpu.memory_space<vmem>>, vector<1x128x512xbf16>
    %83 = vector.shape_cast %82 : vector<1x128x512xbf16> to vector<128x512xbf16>
    %cst_31 = arith.constant dense<0.000000e+00> : vector<16x512xf32>
    %84 = tpu.matmul %80, %83, %cst_31 {dimension_numbers = #tpu.dot_dimension_numbers<[1], [0], [0], [1], [0, 0, 1, 1], [], []>} : vector<16x128xbf16>, vector<128x512xbf16>, vector<16x512xf32> -> vector<16x512xf32>
    %85 = vector.extract_strided_slice %84 {offsets = [0, 0], sizes = [16, 256], strides = [1, 1]} : vector<16x512xf32> to vector<16x256xf32>
    %86 = vector.extract_strided_slice %84 {offsets = [0, 256], sizes = [16, 256], strides = [1, 1]} : vector<16x512xf32> to vector<16x256xf32>
    %87 = arith.negf %85 : vector<16x256xf32>
    %88 = math.exp %87 : vector<16x256xf32>
    %cst_32 = arith.constant 1.000000e+00 : f32
    %89 = vector.broadcast %cst_32 : f32 to vector<16x256xf32>
    %90 = arith.addf %89, %88 : vector<16x256xf32>
    %91 = arith.divf %89, %90 : vector<16x256xf32>
    %92 = arith.mulf %85, %91 : vector<16x256xf32>
    %93 = arith.mulf %92, %86 : vector<16x256xf32>
    %94 = arith.truncf %93 : vector<16x256xf32> to vector<16x256xbf16>
    %95 = arith.index_cast %c0_i32 : i32 to index
    %c0_33 = arith.constant 0 : index
    %c0_34 = arith.constant 0 : index
    %96 = vector.load %arg8[%95, %c0_33, %c0_34] : memref<2x256x128xbf16, #tpu.memory_space<vmem>>, vector<1x256x128xbf16>
    %97 = vector.shape_cast %96 : vector<1x256x128xbf16> to vector<256x128xbf16>
    %cst_35 = arith.constant dense<0.000000e+00> : vector<16x128xf32>
    %98 = tpu.matmul %94, %97, %cst_35 {dimension_numbers = #tpu.dot_dimension_numbers<[1], [0], [0], [1], [0, 0, 1, 1], [], []>} : vector<16x256xbf16>, vector<256x128xbf16>, vector<16x128xf32> -> vector<16x128xf32>
    %99 = arith.addf %64, %98 : vector<16x128xf32>
    %c1_i32 = arith.constant 1 : i32
    %100 = arith.index_cast %c1_i32 : i32 to index
    %c0_36 = arith.constant 0 : index
    %c0_37 = arith.constant 0 : index
    %101 = vector.load %arg3[%100, %c0_36, %c0_37] : memref<2x1x128xf32, #tpu.memory_space<vmem>>, vector<1x1x128xf32>
    %102 = vector.shape_cast %101 : vector<1x1x128xf32> to vector<1x128xf32>
    %103 = arith.mulf %99, %99 : vector<16x128xf32>
    %cst_38 = arith.constant dense<0.000000e+00> : vector<16xf32>
    %104 = vector.multi_reduction <add>, %103, %cst_38 [1] : vector<16x128xf32> to vector<16xf32>
    %105 = vector.shape_cast %104 : vector<16xf32> to vector<16x1xf32>
    %cst_39 = arith.constant 1.280000e+02 : f32
    %106 = vector.broadcast %cst_39 : f32 to vector<16x1xf32>
    %107 = arith.divf %105, %106 : vector<16x1xf32>
    %cst_40 = arith.constant 9.99999997E-7 : f32
    %108 = vector.broadcast %cst_40 : f32 to vector<16x1xf32>
    %109 = arith.addf %107, %108 : vector<16x1xf32>
    %110 = math.rsqrt %109 : vector<16x1xf32>
    %111 = vector.broadcast %110 : vector<16x1xf32> to vector<16x128xf32>
    %112 = arith.mulf %99, %111 : vector<16x128xf32>
    %113 = vector.broadcast %102 : vector<1x128xf32> to vector<16x128xf32>
    %114 = arith.mulf %112, %113 : vector<16x128xf32>
    %115 = arith.truncf %114 : vector<16x128xf32> to vector<16x128xbf16>
    %116 = arith.index_cast %c1_i32 : i32 to index
    %c0_41 = arith.constant 0 : index
    %c0_42 = arith.constant 0 : index
    %117 = vector.load %arg4[%116, %c0_41, %c0_42] : memref<2x128x384xbf16, #tpu.memory_space<vmem>>, vector<1x128x384xbf16>
    %118 = vector.shape_cast %117 : vector<1x128x384xbf16> to vector<128x384xbf16>
    %cst_43 = arith.constant dense<0.000000e+00> : vector<16x384xf32>
    %119 = tpu.matmul %115, %118, %cst_43 {dimension_numbers = #tpu.dot_dimension_numbers<[1], [0], [0], [1], [0, 0, 1, 1], [], []>} : vector<16x128xbf16>, vector<128x384xbf16>, vector<16x384xf32> -> vector<16x384xf32>
    %120 = vector.extract_strided_slice %119 {offsets = [0, 0], sizes = [16, 128], strides = [1, 1]} : vector<16x384xf32> to vector<16x128xf32>
    %121 = vector.extract_strided_slice %119 {offsets = [0, 128], sizes = [16, 128], strides = [1, 1]} : vector<16x384xf32> to vector<16x128xf32>
    %122 = vector.extract_strided_slice %119 {offsets = [0, 256], sizes = [16, 128], strides = [1, 1]} : vector<16x384xf32> to vector<16x128xf32>
    %123 = vector.extract_strided_slice %120 {offsets = [0, 0], sizes = [8, 128], strides = [1, 1]} : vector<16x128xf32> to vector<8x128xf32>
    %124 = vector.extract_strided_slice %121 {offsets = [0, 0], sizes = [8, 128], strides = [1, 1]} : vector<16x128xf32> to vector<8x128xf32>
    %cst_44 = arith.constant dense<0.000000e+00> : vector<8x8xf32>
    %125 = tpu.matmul %123, %124, %cst_44 {dimension_numbers = #tpu.dot_dimension_numbers<[1], [1], [0], [0], [0, 0, 1, 0], [], []>} : vector<8x128xf32>, vector<8x128xf32>, vector<8x8xf32> -> vector<8x8xf32>
    %c0_45 = arith.constant 0 : index
    %c0_46 = arith.constant 0 : index
    %c0_47 = arith.constant 0 : index
    %126 = vector.load %arg1[%c0_45, %c0_46, %c0_47] : memref<2x8x8xf32, #tpu.memory_space<vmem>>, vector<1x8x8xf32>
    %127 = vector.shape_cast %126 : vector<1x8x8xf32> to vector<8x8xf32>
    %128 = arith.addf %125, %127 : vector<8x8xf32>
    %cst_48 = arith.constant dense<0xFF800000> : vector<8xf32>
    %129 = vector.multi_reduction <maximumf>, %128, %cst_48 [1] : vector<8x8xf32> to vector<8xf32>
    %130 = vector.shape_cast %129 : vector<8xf32> to vector<8x1xf32>
    %131 = vector.broadcast %130 : vector<8x1xf32> to vector<8x8xf32>
    %132 = arith.subf %128, %131 : vector<8x8xf32>
    %133 = math.exp %132 : vector<8x8xf32>
    %cst_49 = arith.constant dense<0.000000e+00> : vector<8xf32>
    %134 = vector.multi_reduction <add>, %133, %cst_49 [1] : vector<8x8xf32> to vector<8xf32>
    %135 = vector.shape_cast %134 : vector<8xf32> to vector<8x1xf32>
    %136 = vector.broadcast %135 : vector<8x1xf32> to vector<8x8xf32>
    %137 = arith.divf %133, %136 : vector<8x8xf32>
    %138 = vector.extract_strided_slice %122 {offsets = [0, 0], sizes = [8, 128], strides = [1, 1]} : vector<16x128xf32> to vector<8x128xf32>
    %cst_50 = arith.constant dense<0.000000e+00> : vector<8x128xf32>
    %139 = tpu.matmul %137, %138, %cst_50 {dimension_numbers = #tpu.dot_dimension_numbers<[1], [0], [0], [1], [0, 0, 1, 1], [], []>} : vector<8x8xf32>, vector<8x128xf32>, vector<8x128xf32> -> vector<8x128xf32>
    %140 = vector.extract_strided_slice %120 {offsets = [8, 0], sizes = [8, 128], strides = [1, 1]} : vector<16x128xf32> to vector<8x128xf32>
    %141 = vector.extract_strided_slice %121 {offsets = [8, 0], sizes = [8, 128], strides = [1, 1]} : vector<16x128xf32> to vector<8x128xf32>
    %cst_51 = arith.constant dense<0.000000e+00> : vector<8x8xf32>
    %142 = tpu.matmul %140, %141, %cst_51 {dimension_numbers = #tpu.dot_dimension_numbers<[1], [1], [0], [0], [0, 0, 1, 0], [], []>} : vector<8x128xf32>, vector<8x128xf32>, vector<8x8xf32> -> vector<8x8xf32>
    %c1_52 = arith.constant 1 : index
    %c0_53 = arith.constant 0 : index
    %c0_54 = arith.constant 0 : index
    %143 = vector.load %arg1[%c1_52, %c0_53, %c0_54] : memref<2x8x8xf32, #tpu.memory_space<vmem>>, vector<1x8x8xf32>
    %144 = vector.shape_cast %143 : vector<1x8x8xf32> to vector<8x8xf32>
    %145 = arith.addf %142, %144 : vector<8x8xf32>
    %cst_55 = arith.constant dense<0xFF800000> : vector<8xf32>
    %146 = vector.multi_reduction <maximumf>, %145, %cst_55 [1] : vector<8x8xf32> to vector<8xf32>
    %147 = vector.shape_cast %146 : vector<8xf32> to vector<8x1xf32>
    %148 = vector.broadcast %147 : vector<8x1xf32> to vector<8x8xf32>
    %149 = arith.subf %145, %148 : vector<8x8xf32>
    %150 = math.exp %149 : vector<8x8xf32>
    %cst_56 = arith.constant dense<0.000000e+00> : vector<8xf32>
    %151 = vector.multi_reduction <add>, %150, %cst_56 [1] : vector<8x8xf32> to vector<8xf32>
    %152 = vector.shape_cast %151 : vector<8xf32> to vector<8x1xf32>
    %153 = vector.broadcast %152 : vector<8x1xf32> to vector<8x8xf32>
    %154 = arith.divf %150, %153 : vector<8x8xf32>
    %155 = vector.extract_strided_slice %122 {offsets = [8, 0], sizes = [8, 128], strides = [1, 1]} : vector<16x128xf32> to vector<8x128xf32>
    %cst_57 = arith.constant dense<0.000000e+00> : vector<8x128xf32>
    %156 = tpu.matmul %154, %155, %cst_57 {dimension_numbers = #tpu.dot_dimension_numbers<[1], [0], [0], [1], [0, 0, 1, 1], [], []>} : vector<8x8xf32>, vector<8x128xf32>, vector<8x128xf32> -> vector<8x128xf32>
    %157 = tpu.concatenate %139, %156 in 0 : vector<8x128xf32>, vector<8x128xf32> -> vector<16x128xf32>
    %158 = arith.truncf %157 : vector<16x128xf32> to vector<16x128xbf16>
    %159 = arith.index_cast %c1_i32 : i32 to index
    %c0_58 = arith.constant 0 : index
    %c0_59 = arith.constant 0 : index
    %160 = vector.load %arg5[%159, %c0_58, %c0_59] : memref<2x128x128xbf16, #tpu.memory_space<vmem>>, vector<1x128x128xbf16>
    %161 = vector.shape_cast %160 : vector<1x128x128xbf16> to vector<128x128xbf16>
    %cst_60 = arith.constant dense<0.000000e+00> : vector<16x128xf32>
    %162 = tpu.matmul %158, %161, %cst_60 {dimension_numbers = #tpu.dot_dimension_numbers<[1], [0], [0], [1], [0, 0, 1, 1], [], []>} : vector<16x128xbf16>, vector<128x128xbf16>, vector<16x128xf32> -> vector<16x128xf32>
    %163 = arith.addf %99, %162 : vector<16x128xf32>
    %164 = arith.index_cast %c1_i32 : i32 to index
    %c0_61 = arith.constant 0 : index
    %c0_62 = arith.constant 0 : index
    %165 = vector.load %arg6[%164, %c0_61, %c0_62] : memref<2x1x128xf32, #tpu.memory_space<vmem>>, vector<1x1x128xf32>
    %166 = vector.shape_cast %165 : vector<1x1x128xf32> to vector<1x128xf32>
    %167 = arith.mulf %163, %163 : vector<16x128xf32>
    %cst_63 = arith.constant dense<0.000000e+00> : vector<16xf32>
    %168 = vector.multi_reduction <add>, %167, %cst_63 [1] : vector<16x128xf32> to vector<16xf32>
    %169 = vector.shape_cast %168 : vector<16xf32> to vector<16x1xf32>
    %cst_64 = arith.constant 1.280000e+02 : f32
    %170 = vector.broadcast %cst_64 : f32 to vector<16x1xf32>
    %171 = arith.divf %169, %170 : vector<16x1xf32>
    %cst_65 = arith.constant 9.99999997E-7 : f32
    %172 = vector.broadcast %cst_65 : f32 to vector<16x1xf32>
    %173 = arith.addf %171, %172 : vector<16x1xf32>
    %174 = math.rsqrt %173 : vector<16x1xf32>
    %175 = vector.broadcast %174 : vector<16x1xf32> to vector<16x128xf32>
    %176 = arith.mulf %163, %175 : vector<16x128xf32>
    %177 = vector.broadcast %166 : vector<1x128xf32> to vector<16x128xf32>
    %178 = arith.mulf %176, %177 : vector<16x128xf32>
    %179 = arith.truncf %178 : vector<16x128xf32> to vector<16x128xbf16>
    %180 = arith.index_cast %c1_i32 : i32 to index
    %c0_66 = arith.constant 0 : index
    %c0_67 = arith.constant 0 : index
    %181 = vector.load %arg7[%180, %c0_66, %c0_67] : memref<2x128x512xbf16, #tpu.memory_space<vmem>>, vector<1x128x512xbf16>
    %182 = vector.shape_cast %181 : vector<1x128x512xbf16> to vector<128x512xbf16>
    %cst_68 = arith.constant dense<0.000000e+00> : vector<16x512xf32>
    %183 = tpu.matmul %179, %182, %cst_68 {dimension_numbers = #tpu.dot_dimension_numbers<[1], [0], [0], [1], [0, 0, 1, 1], [], []>} : vector<16x128xbf16>, vector<128x512xbf16>, vector<16x512xf32> -> vector<16x512xf32>
    %184 = vector.extract_strided_slice %183 {offsets = [0, 0], sizes = [16, 256], strides = [1, 1]} : vector<16x512xf32> to vector<16x256xf32>
    %185 = vector.extract_strided_slice %183 {offsets = [0, 256], sizes = [16, 256], strides = [1, 1]} : vector<16x512xf32> to vector<16x256xf32>
    %186 = arith.negf %184 : vector<16x256xf32>
    %187 = math.exp %186 : vector<16x256xf32>
    %cst_69 = arith.constant 1.000000e+00 : f32
    %188 = vector.broadcast %cst_69 : f32 to vector<16x256xf32>
    %189 = arith.addf %188, %187 : vector<16x256xf32>
    %190 = arith.divf %188, %189 : vector<16x256xf32>
    %191 = arith.mulf %184, %190 : vector<16x256xf32>
    %192 = arith.mulf %191, %185 : vector<16x256xf32>
    %193 = arith.truncf %192 : vector<16x256xf32> to vector<16x256xbf16>
    %194 = arith.index_cast %c1_i32 : i32 to index
    %c0_70 = arith.constant 0 : index
    %c0_71 = arith.constant 0 : index
    %195 = vector.load %arg8[%194, %c0_70, %c0_71] : memref<2x256x128xbf16, #tpu.memory_space<vmem>>, vector<1x256x128xbf16>
    %196 = vector.shape_cast %195 : vector<1x256x128xbf16> to vector<256x128xbf16>
    %cst_72 = arith.constant dense<0.000000e+00> : vector<16x128xf32>
    %197 = tpu.matmul %193, %196, %cst_72 {dimension_numbers = #tpu.dot_dimension_numbers<[1], [0], [0], [1], [0, 0, 1, 1], [], []>} : vector<16x256xbf16>, vector<256x128xbf16>, vector<16x128xf32> -> vector<16x128xf32>
    %198 = arith.addf %163, %197 : vector<16x128xf32>
    %c2_i32 = arith.constant 2 : i32
    %c0_73 = arith.constant 0 : index
    %c0_74 = arith.constant 0 : index
    %199 = vector.load %arg9[%c0_73, %c0_74] : memref<1x128xf32, #tpu.memory_space<vmem>>, vector<1x128xf32>
    %200 = arith.mulf %198, %198 : vector<16x128xf32>
    %cst_75 = arith.constant dense<0.000000e+00> : vector<16xf32>
    %201 = vector.multi_reduction <add>, %200, %cst_75 [1] : vector<16x128xf32> to vector<16xf32>
    %202 = vector.shape_cast %201 : vector<16xf32> to vector<16x1xf32>
    %cst_76 = arith.constant 1.280000e+02 : f32
    %203 = vector.broadcast %cst_76 : f32 to vector<16x1xf32>
    %204 = arith.divf %202, %203 : vector<16x1xf32>
    %cst_77 = arith.constant 9.99999997E-7 : f32
    %205 = vector.broadcast %cst_77 : f32 to vector<16x1xf32>
    %206 = arith.addf %204, %205 : vector<16x1xf32>
    %207 = math.rsqrt %206 : vector<16x1xf32>
    %208 = vector.broadcast %207 : vector<16x1xf32> to vector<16x128xf32>
    %209 = arith.mulf %198, %208 : vector<16x128xf32>
    %210 = vector.broadcast %199 : vector<1x128xf32> to vector<16x128xf32>
    %211 = arith.mulf %209, %210 : vector<16x128xf32>
    %212 = arith.truncf %211 : vector<16x128xf32> to vector<16x128xbf16>
    %c0_78 = arith.constant 0 : index
    %c0_79 = arith.constant 0 : index
    %213 = vector.load %arg10[%c0_78, %c0_79] : memref<128x256xbf16, #tpu.memory_space<vmem>>, vector<128x256xbf16>
    %cst_80 = arith.constant dense<0.000000e+00> : vector<16x256xf32>
    %214 = tpu.matmul %212, %213, %cst_80 {dimension_numbers = #tpu.dot_dimension_numbers<[1], [0], [0], [1], [0, 0, 1, 1], [], []>} : vector<16x128xbf16>, vector<128x256xbf16>, vector<16x256xf32> -> vector<16x256xf32>
    %c0_81 = arith.constant 0 : index
    %c0_82 = arith.constant 0 : index
    %215 = vector.load %arg11[%c0_81, %c0_82] : memref<16x256xf32, #tpu.memory_space<vmem>>, vector<16x256xf32>
    tpu.vector_store %arg11[%c0_81, %c0_82], %214 {strides = array<i32>} : memref<16x256xf32, #tpu.memory_space<vmem>>, vector<16x256xf32>,
    %cst_83 = arith.constant dense<0xFF800000> : vector<16xf32>
    %216 = vector.multi_reduction <maximumf>, %214, %cst_83 [1] : vector<16x256xf32> to vector<16xf32>
    %217 = vector.shape_cast %216 : vector<16xf32> to vector<16x1xf32>
    %218 = vector.broadcast %217 : vector<16x1xf32> to vector<16x256xf32>
    %219 = arith.subf %214, %218 : vector<16x256xf32>
    %220 = math.exp %219 : vector<16x256xf32>
    %cst_84 = arith.constant dense<0.000000e+00> : vector<16xf32>
    %221 = vector.multi_reduction <add>, %220, %cst_84 [1] : vector<16x256xf32> to vector<16xf32>
    %222 = vector.shape_cast %221 : vector<16xf32> to vector<16x1xf32>
    %223 = math.log %222 : vector<16x1xf32>
    %224 = arith.addf %217, %223 : vector<16x1xf32>
    %c0_85 = arith.constant 0 : index
    %c0_86 = arith.constant 0 : index
    %225 = vector.load %arg2[%c0_85, %c0_86] : memref<16x1xi32, #tpu.memory_space<vmem>>, vector<16x1xi32>
    %c-100_i32 = arith.constant -100 : i32
    %226 = vector.broadcast %c-100_i32 : i32 to vector<16x1xi32>
    %227 = arith.cmpi ne, %225, %226 : vector<16x1xi32>
    %228 = tpu.iota {dimensions = array<i32: 1>} : vector<16x256xi32>
    %229 = vector.broadcast %225 : vector<16x1xi32> to vector<16x256xi32>
    %230 = arith.cmpi eq, %229, %228 : vector<16x256xi32>
    %cst_87 = arith.constant 0.000000e+00 : f32
    %231 = vector.broadcast %cst_87 : f32 to vector<16x256xf32>
    %232 = arith.select %230, %214, %231 : vector<16x256xi1>, vector<16x256xf32>
    %cst_88 = arith.constant dense<0.000000e+00> : vector<16xf32>
    %233 = vector.multi_reduction <add>, %232, %cst_88 [1] : vector<16x256xf32> to vector<16xf32>
    %234 = vector.shape_cast %233 : vector<16xf32> to vector<16x1xf32>
    %235 = arith.subf %224, %234 : vector<16x1xf32>
    %cst_89 = arith.constant 0.000000e+00 : f32
    %236 = vector.broadcast %cst_89 : f32 to vector<16x1xf32>
    %237 = arith.select %227, %235, %236 : vector<16x1xi1>, vector<16x1xf32>
    %238 = vector.shape_cast %237 : vector<16x1xf32> to vector<1x16x1xf32>
    %cst_90 = arith.constant dense<0.000000e+00> : vector<1xf32>
    %239 = vector.multi_reduction <add>, %238, %cst_90 [1, 2] : vector<1x16x1xf32> to vector<1xf32>
    %240 = vector.shape_cast %239 : vector<1xf32> to vector<1x1x1xf32>
    %241 = vector.extract %240[0, 0, 0] : f32 from vector<1x1x1xf32>
    %242 = arith.extui %227 : vector<16x1xi1> to vector<16x1xi32>
    %243 = arith.sitofp %242 : vector<16x1xi32> to vector<16x1xf32>
    %244 = vector.shape_cast %243 : vector<16x1xf32> to vector<1x16x1xf32>
    %cst_91 = arith.constant dense<0.000000e+00> : vector<1xf32>
    %245 = vector.multi_reduction <add>, %244, %cst_91 [1, 2] : vector<1x16x1xf32> to vector<1xf32>
    %246 = vector.shape_cast %245 : vector<1xf32> to vector<1x1x1xf32>
    %247 = vector.extract %246[0, 0, 0] : f32 from vector<1x1x1xf32>
    %cst_92 = arith.constant 1.000000e+00 : f32
    %248 = arith.maximumf %247, %cst_92 : f32
    %249 = arith.divf %241, %248 : f32
    %c0_93 = arith.constant 0 : index
    %c0_94 = arith.constant 0 : index
    %250 = memref.load %arg12[%c0_93, %c0_94] : memref<1x1xf32, #tpu.memory_space<smem>>
    memref.store %249, %arg12[%c0_93, %c0_94] : memref<1x1xf32, #tpu.memory_space<smem>>
    return
  }
}

</mosaic_0001>

<llo_original>
// kernel: tpu_custom_call.1
$region0: #{tpu_custom_call.1}
  #allocation0 [shape = 'u32[]', space=smem, size = 0x4, offset = 0x4, fixed_abs, tag = 'smem constant byte address 0x4 - core index']
  #allocation1 [shape = 'u32[72,128]{1,0:T(1,128)}', space=vmem, size = 0x9000, scoped, tag = 'internal scratch']
  %s0 = inlined_call_operand.vmem [shape: f32[16,128], index: 0, kind: input, shape index: {}]
  %s1 = inlined_call_operand.hbm [shape: f32[2,8,8], index: 1, kind: input, shape index: {}]
  %s2 = inlined_call_operand.vmem [shape: s32[16,1], index: 2, kind: input, shape index: {}]
  %s3 = inlined_call_operand.hbm [shape: f32[2,1,128], index: 3, kind: input, shape index: {}]
  %s4 = inlined_call_operand.hbm [shape: bf16[2,128,384], index: 4, kind: input, shape index: {}]
  %s5 = inlined_call_operand.hbm [shape: bf16[2,128,128], index: 5, kind: input, shape index: {}]
  %s6 = inlined_call_operand.vmem [shape: f32[2,1,128], index: 6, kind: input, shape index: {}]
  %s7 = inlined_call_operand.hbm [shape: bf16[2,128,512], index: 7, kind: input, shape index: {}]
  %s8 = inlined_call_operand.hbm [shape: bf16[2,256,128], index: 8, kind: input, shape index: {}]
  %s9 = inlined_call_operand.vmem [shape: f32[1,128], index: 9, kind: input, shape index: {}]
  %s10 = inlined_call_operand.hbm [shape: bf16[128,256], index: 10, kind: input, shape index: {}]
  %s11 = inlined_call_operand.hbm [shape: f32[16,256], index: 11, kind: output, shape index: {0}]
  %s12 = inlined_call_operand.hbm [shape: f32[1,1], index: 12, kind: output, shape index: {1}]
  %13 = xla_tuple %s11, %s12
  %s14 = sld [smem:[#allocation0]]
  $region90: #{tpu_custom_call.1} parent=0
    _
  %s16 = ssub.s32 1, %s14
  %s17 = scalar_select 0, %s16, %s14
  $region1: #{tpu_custom_call.1} parent=0
    #allocation2 [shape = 'u8[8192]{0}', space=vmem, size = 0x2000, scoped, tag = 'input window, operand 1, single buffered']
    #allocation3 [shape = 's32[1]{0}', space=sflag, size = 0x4, scoped, tag = 'scoped memory for tpu_custom_call.1']
    #allocation4 [shape = 's32[1]{0}', space=sflag, size = 0x4, scoped, tag = 'scoped memory for tpu_custom_call.1']
    #allocation5 [shape = 's32[1]{0}', space=sflag, size = 0x4, scoped, tag = 'scoped memory for tpu_custom_call.1']
    #allocation6 [shape = 'u8[1024]{0}', space=vmem, size = 0x400, scoped, tag = 'input window, operand 3, single buffered']
    #allocation7 [shape = 's32[1]{0}', space=sflag, size = 0x4, scoped, tag = 'scoped memory for tpu_custom_call.1']
    #allocation8 [shape = 'u8[196608]{0}', space=vmem, size = 0x30000, scoped, tag = 'input window, operand 4, single buffered']
    #allocation9 [shape = 'u8[65536]{0}', space=vmem, size = 0x10000, scoped, tag = 'input window, operand 5, single buffered']
    #allocation10 [shape = 's32[1]{0}', space=sflag, size = 0x4, scoped, tag = 'scoped memory for tpu_custom_call.1']
    #allocation11 [shape = 'u8[262144]{0}', space=vmem, size = 0x40000, scoped, tag = 'input window, operand 7, single buffered']
    #allocation12 [shape = 'u8[131072]{0}', space=vmem, size = 0x20000, scoped, tag = 'input window, operand 8, single buffered']
    #allocation13 [shape = 's32[1]{0}', space=sflag, size = 0x4, scoped, tag = 'scoped memory for tpu_custom_call.1']
    #allocation14 [shape = 'u8[65536]{0}', space=vmem, size = 0x10000, scoped, tag = 'input window, operand 10, single buffered']
    #allocation15 [shape = 'u8[16384]{0}', space=vmem, size = 0x4000, scoped, tag = 'output window, operand 0, single buffered']
    #allocation16 [shape = 'u8[512]{0}', space=smem, size = 0x200, scoped, tag = 'output window, operand 1, single buffered']
    %18 = vsyncpa [#allocation3], 0
    %19 = vsyncpa [#allocation7], 0
    %20 = vsyncpa [#allocation10], 0
    %21 = vsyncpa [#allocation13], 0
    %22 = vsyncpa [#allocation4], 0
    %23 = vsyncpa [#allocation5], 0
    // Predicated region
    $region2: #{tpu_custom_call.1} parent=1 // pred_check
      _
    $region3: #{tpu_custom_call.1} parent=1 // pred_check_branch
      %25 = sbr.rel (0) target = $region5
    $region4: #{tpu_custom_call.1} parent=1 // pred_region
      _
    $region5: #{tpu_custom_call.1} parent=1 // pred_fallthru
      _
    // Predicated region
    $region6: #{tpu_custom_call.1} parent=1 // pred_check
      _
    $region7: #{tpu_custom_call.1} parent=1 // pred_check_branch
      %27 = sbr.rel (0) target = $region9
    $region8: #{tpu_custom_call.1} parent=1 // pred_region
      %29 = vsyncadd [#allocation3], 0
      %s30 = sshll.u32 %s1, 4
      %s31 = int_to_ptr.hbm [resolvable:$true] %s30
      %s32 = sshll.u32 [#allocation2], 4
      %s33 = int_to_ptr.vmem [resolvable:$true] %s32
      %38 = dma.hbm_to_vmem [thread:$0]  %s31, 256, %s33, [#allocation3], 128, 128, 8
    $region9: #{tpu_custom_call.1} parent=1 // pred_fallthru
      _
    // Predicated region
    $region10: #{tpu_custom_call.1} parent=1 // pred_check
      _
    $region11: #{tpu_custom_call.1} parent=1 // pred_check_branch
      %40 = sbr.rel (0) target = $region13
    $region12: #{tpu_custom_call.1} parent=1 // pred_region
      _
    $region13: #{tpu_custom_call.1} parent=1 // pred_fallthru
      _
    // Predicated region
    $region14: #{tpu_custom_call.1} parent=1 // pred_check
      _
    $region15: #{tpu_custom_call.1} parent=1 // pred_check_branch
      %42 = sbr.rel (0) target = $region17
    $region16: #{tpu_custom_call.1} parent=1 // pred_region
      %44 = vsyncadd [#allocation7], 0
      %s45 = sshll.u32 %s3, 4
      %s46 = int_to_ptr.hbm [resolvable:$true] %s45
      %s47 = sshll.u32 [#allocation6], 4
      %s48 = int_to_ptr.vmem [resolvable:$true] %s47
      %53 = dma.hbm_to_vmem [thread:$0]  %s46, 32, %s48, [#allocation7], 16, 16, 1
    $region17: #{tpu_custom_call.1} parent=1 // pred_fallthru
      _
    // Predicated region
    $region18: #{tpu_custom_call.1} parent=1 // pred_check
      _
    $region19: #{tpu_custom_call.1} parent=1 // pred_check_branch
      %55 = sbr.rel (0) target = $region21
    $region20: #{tpu_custom_call.1} parent=1 // pred_region
      %57 = vsyncadd [#allocation7], 0
      %s58 = sshll.u32 %s4, 4
      %s59 = int_to_ptr.hbm [resolvable:$true] %s58
      %s60 = sshll.u32 [#allocation8], 4
      %s61 = int_to_ptr.vmem [resolvable:$true] %s60
      %66 = dma.hbm_to_vmem [thread:$0]  %s59, 6144, %s61, [#allocation7], 192, 192, 12
    $region21: #{tpu_custom_call.1} parent=1 // pred_fallthru
      _
    // Predicated region
    $region22: #{tpu_custom_call.1} parent=1 // pred_check
      _
    $region23: #{tpu_custom_call.1} parent=1 // pred_check_branch
      %68 = sbr.rel (0) target = $region25
    $region24: #{tpu_custom_call.1} parent=1 // pred_region
      %70 = vsyncadd [#allocation10], 0
      %s71 = sshll.u32 %s5, 4
      %s72 = int_to_ptr.hbm [resolvable:$true] %s71
      %s73 = sshll.u32 [#allocation9], 4
      %s74 = int_to_ptr.vmem [resolvable:$true] %s73
      %79 = dma.hbm_to_vmem [thread:$0]  %s72, 2048, %s74, [#allocation10], 64, 64, 4
    $region25: #{tpu_custom_call.1} parent=1 // pred_fallthru
      _
    // Predicated region
    $region26: #{tpu_custom_call.1} parent=1 // pred_check
      _
    $region27: #{tpu_custom_call.1} parent=1 // pred_check_branch
      %81 = sbr.rel (0) target = $region29
    $region28: #{tpu_custom_call.1} parent=1 // pred_region
      _
    $region29: #{tpu_custom_call.1} parent=1 // pred_fallthru
      _
    // Predicated region
    $region30: #{tpu_custom_call.1} parent=1 // pred_check
      _
    $region31: #{tpu_custom_call.1} parent=1 // pred_check_branch
      %83 = sbr.rel (0) target = $region33
    $region32: #{tpu_custom_call.1} parent=1 // pred_region
      %85 = vsyncadd [#allocation10], 0
      %s86 = sshll.u32 %s7, 4
      %s87 = int_to_ptr.hbm [resolvable:$true] %s86
      %s88 = sshll.u32 [#allocation11], 4
      %s89 = int_to_ptr.vmem [resolvable:$true] %s88
      %94 = dma.hbm_to_vmem [thread:$0]  %s87, 8192, %s89, [#allocation10], 256, 256, 16
    $region33: #{tpu_custom_call.1} parent=1 // pred_fallthru
      _
    // Predicated region
    $region34: #{tpu_custom_call.1} parent=1 // pred_check
      _
    $region35: #{tpu_custom_call.1} parent=1 // pred_check_branch
      %96 = sbr.rel (0) target = $region37
    $region36: #{tpu_custom_call.1} parent=1 // pred_region
      %98 = vsyncadd [#allocation13], 0
      %s99 = sshll.u32 %s8, 4
      %s100 = int_to_ptr.hbm [resolvable:$true] %s99
      %s101 = sshll.u32 [#allocation12], 4
      %s102 = int_to_ptr.vmem [resolvable:$true] %s101
      %107 = dma.hbm_to_vmem [thread:$0]  %s100, 4096, %s102, [#allocation13], 64, 64, 4
    $region37: #{tpu_custom_call.1} parent=1 // pred_fallthru
      _
    // Predicated region
    $region38: #{tpu_custom_call.1} parent=1 // pred_check
      _
    $region39: #{tpu_custom_call.1} parent=1 // pred_check_branch
      %109 = sbr.rel (0) target = $region41
    $region40: #{tpu_custom_call.1} parent=1 // pred_region
      _
    $region41: #{tpu_custom_call.1} parent=1 // pred_fallthru
      _
    // Predicated region
    $region42: #{tpu_custom_call.1} parent=1 // pred_check
      _
    $region43: #{tpu_custom_call.1} parent=1 // pred_check_branch
      %111 = sbr.rel (0) target = $region45
    $region44: #{tpu_custom_call.1} parent=1 // pred_region
      %113 = vsyncadd [#allocation13], 0
      %s114 = sshll.u32 %s10, 4
      %s115 = int_to_ptr.hbm [resolvable:$true] %s114
      %s116 = sshll.u32 [#allocation14], 4
      %s117 = int_to_ptr.vmem [resolvable:$true] %s116
      %122 = dma.hbm_to_vmem [thread:$0]  %s115, 2048, %s117, [#allocation13], 128, 128, 8
    $region45: #{tpu_custom_call.1} parent=1 // pred_fallthru
      _
    // Predicated region
    $region46: #{tpu_custom_call.1} parent=1 // pred_check
      _
    $region47: #{tpu_custom_call.1} parent=1 // pred_check_branch
      %124 = sbr.rel (0) target = $region49
    $region48: #{tpu_custom_call.1} parent=1 // pred_region
      %126 = dma.done [#allocation3], 256
    $region49: #{tpu_custom_call.1} parent=1 // pred_fallthru
      _
    // Predicated region
    $region50: #{tpu_custom_call.1} parent=1 // pred_check
      _
    $region51: #{tpu_custom_call.1} parent=1 // pred_check_branch
      %128 = sbr.rel (0) target = $region53
    $region52: #{tpu_custom_call.1} parent=1 // pred_region
      %130 = dma.done [#allocation7], 32
    $region53: #{tpu_custom_call.1} parent=1 // pred_fallthru
      _
    // Predicated region
    $region54: #{tpu_custom_call.1} parent=1 // pred_check
      _
    $region55: #{tpu_custom_call.1} parent=1 // pred_check_branch
      %132 = sbr.rel (0) target = $region57
    $region56: #{tpu_custom_call.1} parent=1 // pred_region
      %134 = dma.done [#allocation7], 6144
    $region57: #{tpu_custom_call.1} parent=1 // pred_fallthru
      _
    // Predicated region
    $region58: #{tpu_custom_call.1} parent=1 // pred_check
      _
    $region59: #{tpu_custom_call.1} parent=1 // pred_check_branch
      %136 = sbr.rel (0) target = $region61
    $region60: #{tpu_custom_call.1} parent=1 // pred_region
      %138 = dma.done [#allocation10], 2048
    $region61: #{tpu_custom_call.1} parent=1 // pred_fallthru
      _
    // Predicated region
    $region62: #{tpu_custom_call.1} parent=1 // pred_check
      _
    $region63: #{tpu_custom_call.1} parent=1 // pred_check_branch
      %140 = sbr.rel (0) target = $region65
    $region64: #{tpu_custom_call.1} parent=1 // pred_region
      %142 = dma.done [#allocation10], 8192
    $region65: #{tpu_custom_call.1} parent=1 // pred_fallthru
      _
    // Predicated region
    $region66: #{tpu_custom_call.1} parent=1 // pred_check
      _
    $region67: #{tpu_custom_call.1} parent=1 // pred_check_branch
      %144 = sbr.rel (0) target = $region69
    $region68: #{tpu_custom_call.1} parent=1 // pred_region
      %146 = dma.done [#allocation13], 4096
    $region69: #{tpu_custom_call.1} parent=1 // pred_fallthru
      _
    // Predicated region
    $region70: #{tpu_custom_call.1} parent=1 // pred_check
      _
    $region71: #{tpu_custom_call.1} parent=1 // pred_check_branch
      %148 = sbr.rel (0) target = $region73
    $region72: #{tpu_custom_call.1} parent=1 // pred_region
      %150 = dma.done [#allocation13], 2048
    $region73: #{tpu_custom_call.1} parent=1 // pred_fallthru
      _
    %v151 = vld [vmem:[%s0] sm:$0xff]
    %v152 = vld [vmem:[%s0 + $0x8] sm:$0xff]
    %v153 = vld [vmem:[#allocation6] sm:$0x1]
    %v154 = vmul.f32 %v151, %v151
    %v155 = vmul.f32 %v152, %v152
    %156 = vadd.xlane.f32.xlu0 %v154
    %v157 = vpop.xlane.xlu0 %156
    %158 = vadd.xlane.f32.xlu0 %v155
    %v159 = vpop.xlane.xlu0 %158
    %v160 = vrcp.pop 128.0
    %v161 = vmul.f32 128.0, %v160
    %v162 = vsub.f32 1.0, %v161
    %v163 = vmul.f32 %v160, %v162
    %v164 = vadd.f32 %v160, %v163
    %vm165 = vweird.f32 %v160
    %v166 = vsel %vm165, %v160, %v164
    %v167 = vmul.f32 %v157, %v166
    %v168 = vmul.f32 %v159, %v166
    %v169 = vadd.f32 %v167, 1e-06
    %v170 = vadd.f32 %v168, 1e-06
    %v171 = vrsqrt.pop %v169
    %v172 = vmul.f32 %v171, %v169
    %v173 = vmul.f32 %v172, %v171
    %v174 = vmul.f32 0.5, %v173
    %v175 = vsub.f32 1.5, %v174
    %v176 = vmul.f32 %v171, %v175
    %vm177 = vweird.f32 %v169
    %vm178 = vweird.f32 %v171
    %vm179 = vmor %vm177, %vm178
    %v180 = vsel %vm179, %v171, %v176
    %v181 = vrsqrt.pop %v170
    %v182 = vmul.f32 %v181, %v170
    %v183 = vmul.f32 %v182, %v181
    %v184 = vmul.f32 0.5, %v183
    %v185 = vsub.f32 1.5, %v184
    %v186 = vmul.f32 %v181, %v185
    %vm187 = vweird.f32 %v170
    %vm188 = vweird.f32 %v181
    %vm189 = vmor %vm187, %vm188
    %v190 = vsel %vm189, %v181, %v186
    %v191 = vmul.f32 %v151, %v180
    %v192 = vmul.f32 %v152, %v190
    %v194 = vperm.slane %v153, 0
    %v196 = vmul.f32 %v191, %v194
    %v197 = vmul.f32 %v192, %v194
    %v198 = vpack.c.bf16 %v197, %v196
    %v199 = vld [vmem:[#allocation8] sm:$0xff]
    %v200 = vld [vmem:[#allocation8 + $0x8] sm:$0xf]
    %v201 = vld [vmem:[#allocation8 + $0xc] sm:$0xff]
    %v202 = vld [vmem:[#allocation8 + $0x14] sm:$0xf]
    %v203 = vld [vmem:[#allocation8 + $0x18] sm:$0xff]
    %v204 = vld [vmem:[#allocation8 + $0x20] sm:$0xf]
    %v205 = vld [vmem:[#allocation8 + $0x24] sm:$0xff]
    %v206 = vld [vmem:[#allocation8 + $0x2c] sm:$0xf]
    %v207 = vld [vmem:[#allocation8 + $0x30] sm:$0xff]
    %v208 = vld [vmem:[#allocation8 + $0x38] sm:$0xf]
    %v209 = vld [vmem:[#allocation8 + $0x3c] sm:$0xff]
    %v210 = vld [vmem:[#allocation8 + $0x44] sm:$0xf]
    %v211 = vld [vmem:[#allocation8 + $0x48] sm:$0xff]
    %v212 = vld [vmem:[#allocation8 + $0x50] sm:$0xf]
    %v213 = vld [vmem:[#allocation8 + $0x54] sm:$0xff]
    %v214 = vld [vmem:[#allocation8 + $0x5c] sm:$0xf]
    %v215 = vld [vmem:[#allocation8 + $0x60] sm:$0xff]
    %v216 = vld [vmem:[#allocation8 + $0x68] sm:$0xf]
    %v217 = vld [vmem:[#allocation8 + $0x6c] sm:$0xff]
    %v218 = vld [vmem:[#allocation8 + $0x74] sm:$0xf]
    %v219 = vld [vmem:[#allocation8 + $0x78] sm:$0xff]
    %v220 = vld [vmem:[#allocation8 + $0x80] sm:$0xf]
    %v221 = vld [vmem:[#allocation8 + $0x84] sm:$0xff]
    %v222 = vld [vmem:[#allocation8 + $0x8c] sm:$0xf]
    %v223 = vld [vmem:[#allocation8 + $0x90] sm:$0xff]
    %v224 = vld [vmem:[#allocation8 + $0x98] sm:$0xf]
    %v225 = vld [vmem:[#allocation8 + $0x9c] sm:$0xff]
    %v226 = vld [vmem:[#allocation8 + $0xa4] sm:$0xf]
    %v227 = vld [vmem:[#allocation8 + $0xa8] sm:$0xff]
    %v228 = vld [vmem:[#allocation8 + $0xb0] sm:$0xf]
    %v229 = vld [vmem:[#allocation8 + $0xb4] sm:$0xff]
    %v230 = vld [vmem:[#allocation8 + $0xbc] sm:$0xf]
    %v263 = vunpack.c.l.b16 %v199
    %v264 = vunpack.c.h.b16 %v199
    %v265 = vunpack.c.l.b16 %v200
    %v266 = vunpack.c.l.b16 %v201
    %v267 = vunpack.c.h.b16 %v201
    %v268 = vunpack.c.l.b16 %v202
    %v269 = vunpack.c.l.b16 %v203
    %v270 = vunpack.c.h.b16 %v203
    %v271 = vunpack.c.l.b16 %v204
    %v272 = vunpack.c.l.b16 %v205
    %v273 = vunpack.c.h.b16 %v205
    %v274 = vunpack.c.l.b16 %v206
    %v275 = vunpack.c.l.b16 %v207
    %v276 = vunpack.c.h.b16 %v207
    %v277 = vunpack.c.l.b16 %v208
    %v278 = vunpack.c.l.b16 %v209
    %v279 = vunpack.c.h.b16 %v209
    %v280 = vunpack.c.l.b16 %v210
    %v281 = vunpack.c.l.b16 %v211
    %v282 = vunpack.c.h.b16 %v211
    %v283 = vunpack.c.l.b16 %v212
    %v284 = vunpack.c.l.b16 %v213
    %v285 = vunpack.c.h.b16 %v213
    %v286 = vunpack.c.l.b16 %v214
    %v287 = vunpack.c.l.b16 %v215
    %v288 = vunpack.c.h.b16 %v215
    %v289 = vunpack.c.l.b16 %v216
    %v290 = vunpack.c.l.b16 %v217
    %v291 = vunpack.c.h.b16 %v217
    %v292 = vunpack.c.l.b16 %v218
    %v293 = vunpack.c.l.b16 %v219
    %v294 = vunpack.c.h.b16 %v219
    %v295 = vunpack.c.l.b16 %v220
    %v296 = vunpack.c.l.b16 %v221
    %v297 = vunpack.c.h.b16 %v221
    %v298 = vunpack.c.l.b16 %v222
    %v299 = vunpack.c.l.b16 %v223
    %v300 = vunpack.c.h.b16 %v223
    %v301 = vunpack.c.l.b16 %v224
    %v302 = vunpack.c.l.b16 %v225
    %v303 = vunpack.c.h.b16 %v225
    %v304 = vunpack.c.l.b16 %v226
    %v305 = vunpack.c.l.b16 %v227
    %v306 = vunpack.c.h.b16 %v227
    %v307 = vunpack.c.l.b16 %v228
    %v308 = vunpack.c.l.b16 %v229
    %v309 = vunpack.c.h.b16 %v229
    %v310 = vunpack.c.l.b16 %v230
    %v311 = vpack.c.b16 %v266, %v263
    %v312 = vpack.c.b16 %v267, %v264
    %v313 = vpack.c.b16 %v268, %v265
    %v314 = vpack.c.b16 %v272, %v269
    %v315 = vpack.c.b16 %v273, %v270
    %v316 = vpack.c.b16 %v274, %v271
    %v317 = vpack.c.b16 %v278, %v275
    %v318 = vpack.c.b16 %v279, %v276
    %v319 = vpack.c.b16 %v280, %v277
    %v320 = vpack.c.b16 %v284, %v281
    %v321 = vpack.c.b16 %v285, %v282
    %v322 = vpack.c.b16 %v286, %v283
    %v323 = vpack.c.b16 %v290, %v287
    %v324 = vpack.c.b16 %v291, %v288
    %v325 = vpack.c.b16 %v292, %v289
    %v326 = vpack.c.b16 %v296, %v293
    %v327 = vpack.c.b16 %v297, %v294
    %v328 = vpack.c.b16 %v298, %v295
    %v329 = vpack.c.b16 %v302, %v299
    %v330 = vpack.c.b16 %v303, %v300
    %v331 = vpack.c.b16 %v304, %v301
    %v332 = vpack.c.b16 %v308, %v305
    %v333 = vpack.c.b16 %v309, %v306
    %v334 = vpack.c.b16 %v310, %v307
    %359 = vmatpush.bf16.msra.mxu0 %v332
    %360 = vmatpush.bf16.msra.mxu0 %v329
    %361 = vmatpush.bf16.msra.mxu0 %v326
    %362 = vmatpush.bf16.msra.mxu0 %v323
    %363 = vmatpush.bf16.msra.mxu0 %v320
    %364 = vmatpush.bf16.msra.mxu0 %v317
    %365 = vmatpush.bf16.msra.mxu0 %v314
    %366 = vmatpush.bf16.msra.mxu0 %v311
    %367 = vmatmul.bf16.gmra.mxu0 %v198
    %v368 = vpop.f32.mrf.mxu0
    %v369 = vadd.f32 0.0, %v368
    %v370 = vpop.f32.mrf.mxu0
    %v371 = vadd.f32 0.0, %v370
    %372 = vdwg.mxu0
    %373 = vmatpush.bf16.msra.mxu0 %v333
    %374 = vmatpush.bf16.msra.mxu0 %v330
    %375 = vmatpush.bf16.msra.mxu0 %v327
    %376 = vmatpush.bf16.msra.mxu0 %v324
    %377 = vmatpush.bf16.msra.mxu0 %v321
    %378 = vmatpush.bf16.msra.mxu0 %v318
    %379 = vmatpush.bf16.msra.mxu0 %v315
    %380 = vmatpush.bf16.msra.mxu0 %v312
    %381 = vmatmul.bf16.gmra.mxu0 %v198
    %v382 = vpop.f32.mrf.mxu0
    %v383 = vadd.f32 0.0, %v382
    %v384 = vpop.f32.mrf.mxu0
    %v385 = vadd.f32 0.0, %v384
    %386 = vdwg.mxu0
    %387 = vmatpush.bf16.msra.mxu0 %v334
    %388 = vmatpush.bf16.msra.mxu0 %v331
    %389 = vmatpush.bf16.msra.mxu0 %v328
    %390 = vmatpush.bf16.msra.mxu0 %v325
    %391 = vmatpush.bf16.msra.mxu0 %v322
    %392 = vmatpush.bf16.msra.mxu0 %v319
    %393 = vmatpush.bf16.msra.mxu0 %v316
    %394 = vmatpush.bf16.msra.mxu0 %v313
    %395 = vmatmul.bf16.gmra.mxu0 %v198
    %v396 = vpop.f32.mrf.mxu0
    %v397 = vadd.f32 0.0, %v396
    %v398 = vpop.f32.mrf.mxu0
    %v399 = vadd.f32 0.0, %v398
    %400 = vdwg.mxu0
    %v401 = vld [vmem:[#allocation2] sm:$0xff]
    %402 = vmatpush.xpose.msra.mxu0 0.0
    %403 = vmatpush.xpose.msra.mxu0 0.0
    %404 = vmatpush.xpose.msra.mxu0 0.0
    %405 = vmatpush.xpose.msra.mxu0 0.0
    %406 = vmatpush.xpose.msra.mxu0 0.0
    %407 = vmatpush.xpose.msra.mxu0 0.0
    %408 = vmatpush.xpose.msra.mxu0 0.0
    %409 = vmatpush.xpose.msra.mxu0 0.0
    %410 = vmatpush.xpose.msra.mxu0 0.0
    %411 = vmatpush.xpose.msra.mxu0 0.0
    %412 = vmatpush.xpose.msra.mxu0 0.0
    %413 = vmatpush.xpose.msra.mxu0 0.0
    %414 = vmatpush.xpose.msra.mxu0 0.0
    %415 = vmatpush.xpose.msra.mxu0 0.0
    %416 = vmatpush.xpose.msra.mxu0 0.0
    %417 = vmatpush.xpose.msra.mxu0 %v383
    %418 = vmatmul.f32.gmra.mxu0 %v369
    %v419 = vpop.f32.mrf.mxu0
    %v420 = vadd.f32 %v401, %v419
    %421 = vdwg.mxu0
    %vm422 = vcmask 64512
    %v423 = vsel %vm422, %v420, -inf
    %424 = vmax.xlane.f32.xlu0 %v423
    %v425 = vpop.xlane.xlu0 %424
    %v426 = vsub.f32 %v420, %v425
    %v427 = vmul.f32 %v426, 1.442695
    %v428 = vpow.pop %v427
    %v429 = vsel %vm422, %v428, 0.0
    %430 = vadd.xlane.f32.xlu0 %v429
    %v431 = vpop.xlane.xlu0 %430
    %v432 = vrcp.pop %v431
    %v433 = vmul.f32 %v431, %v432
    %v434 = vsub.f32 1.0, %v433
    %v435 = vmul.f32 %v432, %v434
    %v436 = vadd.f32 %v432, %v435
    %vm437 = vweird.f32 %v431
    %vm438 = vweird.f32 %v432
    %vm439 = vmor %vm437, %vm438
    %v440 = vsel %vm439, %v432, %v436
    %v441 = vand.u32 2147483647, %v431
    %vm442 = vcmp.eq.f32.partialorder %v441, 8.507059e+37
    %v443 = vand.u32 %v431, 2147483648
    %v444 = vor.u32 1.1754944e-38, %v443
    %v445 = vsel %vm442, %v444, %v440
    %v446 = vmul.f32 %v428, %v445
    %v448 = vsel %vm422, %v446, 0
    %450 = vmatpush.msra.mxu0 0.0
    %451 = vmatpush.msra.mxu0 0.0
    %452 = vmatpush.msra.mxu0 0.0
    %453 = vmatpush.msra.mxu0 0.0
    %454 = vmatpush.msra.mxu0 0.0
    %455 = vmatpush.msra.mxu0 0.0
    %456 = vmatpush.msra.mxu0 0.0
    %457 = vmatpush.msra.mxu0 0.0
    %458 = vmatpush.msra.mxu0 0.0
    %459 = vmatpush.msra.mxu0 0.0
    %460 = vmatpush.msra.mxu0 0.0
    %461 = vmatpush.msra.mxu0 0.0
    %462 = vmatpush.msra.mxu0 0.0
    %463 = vmatpush.msra.mxu0 0.0
    %464 = vmatpush.msra.mxu0 0.0
    %465 = vmatpush.msra.mxu0 %v397
    %466 = vmatmul.f32.gmra.mxu0 %v448
    %v467 = vpop.f32.mrf.mxu0
    %v468 = vadd.f32 0.0, %v467
    %469 = vdwg.mxu0
    %s470 = scalar_lea.vmem [#allocation2], 8
    %v471 = vld [vmem:[%s470] sm:$0xff]
    %472 = vmatpush.xpose.msra.mxu0 0.0
    %473 = vmatpush.xpose.msra.mxu0 0.0
    %474 = vmatpush.xpose.msra.mxu0 0.0
    %475 = vmatpush.xpose.msra.mxu0 0.0
    %476 = vmatpush.xpose.msra.mxu0 0.0
    %477 = vmatpush.xpose.msra.mxu0 0.0
    %478 = vmatpush.xpose.msra.mxu0 0.0
    %479 = vmatpush.xpose.msra.mxu0 0.0
    %480 = vmatpush.xpose.msra.mxu0 0.0
    %481 = vmatpush.xpose.msra.mxu0 0.0
    %482 = vmatpush.xpose.msra.mxu0 0.0
    %483 = vmatpush.xpose.msra.mxu0 0.0
    %484 = vmatpush.xpose.msra.mxu0 0.0
    %485 = vmatpush.xpose.msra.mxu0 0.0
    %486 = vmatpush.xpose.msra.mxu0 0.0
    %487 = vmatpush.xpose.msra.mxu0 %v385
    %488 = vmatmul.f32.gmra.mxu0 %v371
    %v489 = vpop.f32.mrf.mxu0
    %v490 = vadd.f32 %v471, %v489
    %491 = vdwg.mxu0
    %v492 = vsel %vm422, %v490, -inf
    %493 = vmax.xlane.f32.xlu0 %v492
    %v494 = vpop.xlane.xlu0 %493
    %v495 = vsub.f32 %v490, %v494
    %v496 = vmul.f32 %v495, 1.442695
    %v497 = vpow.pop %v496
    %v498 = vsel %vm422, %v497, 0.0
    %499 = vadd.xlane.f32.xlu0 %v498
    %v500 = vpop.xlane.xlu0 %499
    %v501 = vrcp.pop %v500
    %v502 = vmul.f32 %v500, %v501
    %v503 = vsub.f32 1.0, %v502
    %v504 = vmul.f32 %v501, %v503
    %v505 = vadd.f32 %v501, %v504
    %vm506 = vweird.f32 %v500
    %vm507 = vweird.f32 %v501
    %vm508 = vmor %vm506, %vm507
    %v509 = vsel %vm508, %v501, %v505
    %v510 = vand.u32 2147483647, %v500
    %vm511 = vcmp.eq.f32.partialorder %v510, 8.507059e+37
    %v512 = vand.u32 %v500, 2147483648
    %v513 = vor.u32 1.1754944e-38, %v512
    %v514 = vsel %vm511, %v513, %v509
    %v515 = vmul.f32 %v497, %v514
    %v517 = vsel %vm422, %v515, 0
    %519 = vmatpush.msra.mxu0 0.0
    %520 = vmatpush.msra.mxu0 0.0
    %521 = vmatpush.msra.mxu0 0.0
    %522 = vmatpush.msra.mxu0 0.0
    %523 = vmatpush.msra.mxu0 0.0
    %524 = vmatpush.msra.mxu0 0.0
    %525 = vmatpush.msra.mxu0 0.0
    %526 = vmatpush.msra.mxu0 0.0
    %527 = vmatpush.msra.mxu0 0.0
    %528 = vmatpush.msra.mxu0 0.0
    %529 = vmatpush.msra.mxu0 0.0
    %530 = vmatpush.msra.mxu0 0.0
    %531 = vmatpush.msra.mxu0 0.0
    %532 = vmatpush.msra.mxu0 0.0
    %533 = vmatpush.msra.mxu0 0.0
    %534 = vmatpush.msra.mxu0 %v399
    %535 = vmatmul.f32.gmra.mxu0 %v517
    %v536 = vpop.f32.mrf.mxu0
    %v537 = vadd.f32 0.0, %v536
    %538 = vdwg.mxu0
    %v539 = vpack.c.bf16 %v537, %v468
    %v540 = vld [vmem:[#allocation9] sm:$0xf]
    %v541 = vld [vmem:[#allocation9 + $0x4] sm:$0xf]
    %v542 = vld [vmem:[#allocation9 + $0x8] sm:$0xf]
    %v543 = vld [vmem:[#allocation9 + $0xc] sm:$0xf]
    %v544 = vld [vmem:[#allocation9 + $0x10] sm:$0xf]
    %v545 = vld [vmem:[#allocation9 + $0x14] sm:$0xf]
    %v546 = vld [vmem:[#allocation9 + $0x18] sm:$0xf]
    %v547 = vld [vmem:[#allocation9 + $0x1c] sm:$0xf]
    %v548 = vld [vmem:[#allocation9 + $0x20] sm:$0xf]
    %v549 = vld [vmem:[#allocation9 + $0x24] sm:$0xf]
    %v550 = vld [vmem:[#allocation9 + $0x28] sm:$0xf]
    %v551 = vld [vmem:[#allocation9 + $0x2c] sm:$0xf]
    %v552 = vld [vmem:[#allocation9 + $0x30] sm:$0xf]
    %v553 = vld [vmem:[#allocation9 + $0x34] sm:$0xf]
    %v554 = vld [vmem:[#allocation9 + $0x38] sm:$0xf]
    %v555 = vld [vmem:[#allocation9 + $0x3c] sm:$0xf]
    %v572 = vunpack.c.l.b16 %v540
    %v573 = vunpack.c.l.b16 %v541
    %v574 = vunpack.c.l.b16 %v542
    %v575 = vunpack.c.l.b16 %v543
    %v576 = vunpack.c.l.b16 %v544
    %v577 = vunpack.c.l.b16 %v545
    %v578 = vunpack.c.l.b16 %v546
    %v579 = vunpack.c.l.b16 %v547
    %v580 = vunpack.c.l.b16 %v548
    %v581 = vunpack.c.l.b16 %v549
    %v582 = vunpack.c.l.b16 %v550
    %v583 = vunpack.c.l.b16 %v551
    %v584 = vunpack.c.l.b16 %v552
    %v585 = vunpack.c.l.b16 %v553
    %v586 = vunpack.c.l.b16 %v554
    %v587 = vunpack.c.l.b16 %v555
    %v588 = vpack.c.b16 %v573, %v572
    %v589 = vpack.c.b16 %v575, %v574
    %v590 = vpack.c.b16 %v577, %v576
    %v591 = vpack.c.b16 %v579, %v578
    %v592 = vpack.c.b16 %v581, %v580
    %v593 = vpack.c.b16 %v583, %v582
    %v594 = vpack.c.b16 %v585, %v584
    %v595 = vpack.c.b16 %v587, %v586
    %604 = vmatpush.bf16.msra.mxu0 %v595
    %605 = vmatpush.bf16.msra.mxu0 %v594
    %606 = vmatpush.bf16.msra.mxu0 %v593
    %607 = vmatpush.bf16.msra.mxu0 %v592
    %608 = vmatpush.bf16.msra.mxu0 %v591
    %609 = vmatpush.bf16.msra.mxu0 %v590
    %610 = vmatpush.bf16.msra.mxu0 %v589
    %611 = vmatpush.bf16.msra.mxu0 %v588
    %612 = vmatmul.bf16.gmra.mxu0 %v539
    %v613 = vpop.f32.mrf.mxu0
    %v614 = vadd.f32 0.0, %v613
    %v615 = vpop.f32.mrf.mxu0
    %v616 = vadd.f32 0.0, %v615
    %617 = vdwg.mxu0
    %v618 = vadd.f32 %v151, %v614
    %v619 = vadd.f32 %v152, %v616
    %v620 = vld [vmem:[%s6] sm:$0x1]
    %v621 = vmul.f32 %v618, %v618
    %v622 = vmul.f32 %v619, %v619
    %623 = vadd.xlane.f32.xlu0 %v621
    %v624 = vpop.xlane.xlu0 %623
    %625 = vadd.xlane.f32.xlu0 %v622
    %v626 = vpop.xlane.xlu0 %625
    %v627 = vmul.f32 %v624, %v166
    %v628 = vmul.f32 %v626, %v166
    %v629 = vadd.f32 %v627, 1e-06
    %v630 = vadd.f32 %v628, 1e-06
    %v631 = vrsqrt.pop %v629
    %v632 = vmul.f32 %v631, %v629
    %v633 = vmul.f32 %v632, %v631
    %v634 = vmul.f32 0.5, %v633
    %v635 = vsub.f32 1.5, %v634
    %v636 = vmul.f32 %v631, %v635
    %vm637 = vweird.f32 %v629
    %vm638 = vweird.f32 %v631
    %vm639 = vmor %vm637, %vm638
    %v640 = vsel %vm639, %v631, %v636
    %v641 = vrsqrt.pop %v630
    %v642 = vmul.f32 %v641, %v630
    %v643 = vmul.f32 %v642, %v641
    %v644 = vmul.f32 0.5, %v643
    %v645 = vsub.f32 1.5, %v644
    %v646 = vmul.f32 %v641, %v645
    %vm647 = vweird.f32 %v630
    %vm648 = vweird.f32 %v641
    %vm649 = vmor %vm647, %vm648
    %v650 = vsel %vm649, %v641, %v646
    %v651 = vmul.f32 %v618, %v640
    %v652 = vmul.f32 %v619, %v650
    %v654 = vperm.slane %v620, 0
    %v656 = vmul.f32 %v651, %v654
    %v657 = vmul.f32 %v652, %v654
    %v658 = vpack.c.bf16 %v657, %v656
    %v659 = vld [vmem:[#allocation11] sm:$0xff]
    %v660 = vld [vmem:[#allocation11 + $0x8] sm:$0xff]
    %v661 = vld [vmem:[#allocation11 + $0x10] sm:$0xff]
    %v662 = vld [vmem:[#allocation11 + $0x18] sm:$0xff]
    %v663 = vld [vmem:[#allocation11 + $0x20] sm:$0xff]
    %v664 = vld [vmem:[#allocation11 + $0x28] sm:$0xff]
    %v665 = vld [vmem:[#allocation11 + $0x30] sm:$0xff]
    %v666 = vld [vmem:[#allocation11 + $0x38] sm:$0xff]
    %v667 = vld [vmem:[#allocation11 + $0x40] sm:$0xff]
    %v668 = vld [vmem:[#allocation11 + $0x48] sm:$0xff]
    %v669 = vld [vmem:[#allocation11 + $0x50] sm:$0xff]
    %v670 = vld [vmem:[#allocation11 + $0x58] sm:$0xff]
    %v671 = vld [vmem:[#allocation11 + $0x60] sm:$0xff]
    %v672 = vld [vmem:[#allocation11 + $0x68] sm:$0xff]
    %v673 = vld [vmem:[#allocation11 + $0x70] sm:$0xff]
    %v674 = vld [vmem:[#allocation11 + $0x78] sm:$0xff]
    %v675 = vld [vmem:[#allocation11 + $0x80] sm:$0xff]
    %v676 = vld [vmem:[#allocation11 + $0x88] sm:$0xff]
    %v677 = vld [vmem:[#allocation11 + $0x90] sm:$0xff]
    %v678 = vld [vmem:[#allocation11 + $0x98] sm:$0xff]
    %v679 = vld [vmem:[#allocation11 + $0xa0] sm:$0xff]
    %v680 = vld [vmem:[#allocation11 + $0xa8] sm:$0xff]
    %v681 = vld [vmem:[#allocation11 + $0xb0] sm:$0xff]
    %v682 = vld [vmem:[#allocation11 + $0xb8] sm:$0xff]
    %v683 = vld [vmem:[#allocation11 + $0xc0] sm:$0xff]
    %v684 = vld [vmem:[#allocation11 + $0xc8] sm:$0xff]
    %v685 = vld [vmem:[#allocation11 + $0xd0] sm:$0xff]
    %v686 = vld [vmem:[#allocation11 + $0xd8] sm:$0xff]
    %v687 = vld [vmem:[#allocation11 + $0xe0] sm:$0xff]
    %v688 = vld [vmem:[#allocation11 + $0xe8] sm:$0xff]
    %v689 = vld [vmem:[#allocation11 + $0xf0] sm:$0xff]
    %v690 = vld [vmem:[#allocation11 + $0xf8] sm:$0xff]
    %v723 = vunpack.c.l.b16 %v659
    %v724 = vunpack.c.h.b16 %v659
    %v725 = vunpack.c.l.b16 %v660
    %v726 = vunpack.c.h.b16 %v660
    %v727 = vunpack.c.l.b16 %v661
    %v728 = vunpack.c.h.b16 %v661
    %v729 = vunpack.c.l.b16 %v662
    %v730 = vunpack.c.h.b16 %v662
    %v731 = vunpack.c.l.b16 %v663
    %v732 = vunpack.c.h.b16 %v663
    %v733 = vunpack.c.l.b16 %v664
    %v734 = vunpack.c.h.b16 %v664
    %v735 = vunpack.c.l.b16 %v665
    %v736 = vunpack.c.h.b16 %v665
    %v737 = vunpack.c.l.b16 %v666
    %v738 = vunpack.c.h.b16 %v666
    %v739 = vunpack.c.l.b16 %v667
    %v740 = vunpack.c.h.b16 %v667
    %v741 = vunpack.c.l.b16 %v668
    %v742 = vunpack.c.h.b16 %v668
    %v743 = vunpack.c.l.b16 %v669
    %v744 = vunpack.c.h.b16 %v669
    %v745 = vunpack.c.l.b16 %v670
    %v746 = vunpack.c.h.b16 %v670
    %v747 = vunpack.c.l.b16 %v671
    %v748 = vunpack.c.h.b16 %v671
    %v749 = vunpack.c.l.b16 %v672
    %v750 = vunpack.c.h.b16 %v672
    %v751 = vunpack.c.l.b16 %v673
    %v752 = vunpack.c.h.b16 %v673
    %v753 = vunpack.c.l.b16 %v674
    %v754 = vunpack.c.h.b16 %v674
    %v755 = vunpack.c.l.b16 %v675
    %v756 = vunpack.c.h.b16 %v675
    %v757 = vunpack.c.l.b16 %v676
    %v758 = vunpack.c.h.b16 %v676
    %v759 = vunpack.c.l.b16 %v677
    %v760 = vunpack.c.h.b16 %v677
    %v761 = vunpack.c.l.b16 %v678
    %v762 = vunpack.c.h.b16 %v678
    %v763 = vunpack.c.l.b16 %v679
    %v764 = vunpack.c.h.b16 %v679
    %v765 = vunpack.c.l.b16 %v680
    %v766 = vunpack.c.h.b16 %v680
    %v767 = vunpack.c.l.b16 %v681
    %v768 = vunpack.c.h.b16 %v681
    %v769 = vunpack.c.l.b16 %v682
    %v770 = vunpack.c.h.b16 %v682
    %v771 = vunpack.c.l.b16 %v683
    %v772 = vunpack.c.h.b16 %v683
    %v773 = vunpack.c.l.b16 %v684
    %v774 = vunpack.c.h.b16 %v684
    %v775 = vunpack.c.l.b16 %v685
    %v776 = vunpack.c.h.b16 %v685
    %v777 = vunpack.c.l.b16 %v686
    %v778 = vunpack.c.h.b16 %v686
    %v779 = vunpack.c.l.b16 %v687
    %v780 = vunpack.c.h.b16 %v687
    %v781 = vunpack.c.l.b16 %v688
    %v782 = vunpack.c.h.b16 %v688
    %v783 = vunpack.c.l.b16 %v689
    %v784 = vunpack.c.h.b16 %v689
    %v785 = vunpack.c.l.b16 %v690
    %v786 = vunpack.c.h.b16 %v690
    %v787 = vpack.c.b16 %v727, %v723
    %v788 = vpack.c.b16 %v728, %v724
    %v789 = vpack.c.b16 %v729, %v725
    %v790 = vpack.c.b16 %v730, %v726
    %v791 = vpack.c.b16 %v735, %v731
    %v792 = vpack.c.b16 %v736, %v732
    %v793 = vpack.c.b16 %v737, %v733
    %v794 = vpack.c.b16 %v738, %v734
    %v795 = vpack.c.b16 %v743, %v739
    %v796 = vpack.c.b16 %v744, %v740
    %v797 = vpack.c.b16 %v745, %v741
    %v798 = vpack.c.b16 %v746, %v742
    %v799 = vpack.c.b16 %v751, %v747
    %v800 = vpack.c.b16 %v752, %v748
    %v801 = vpack.c.b16 %v753, %v749
    %v802 = vpack.c.b16 %v754, %v750
    %v803 = vpack.c.b16 %v759, %v755
    %v804 = vpack.c.b16 %v760, %v756
    %v805 = vpack.c.b16 %v761, %v757
    %v806 = vpack.c.b16 %v762, %v758
    %v807 = vpack.c.b16 %v767, %v763
    %v808 = vpack.c.b16 %v768, %v764
    %v809 = vpack.c.b16 %v769, %v765
    %v810 = vpack.c.b16 %v770, %v766
    %v811 = vpack.c.b16 %v775, %v771
    %v812 = vpack.c.b16 %v776, %v772
    %v813 = vpack.c.b16 %v777, %v773
    %v814 = vpack.c.b16 %v778, %v774
    %v815 = vpack.c.b16 %v783, %v779
    %v816 = vpack.c.b16 %v784, %v780
    %v817 = vpack.c.b16 %v785, %v781
    %v818 = vpack.c.b16 %v786, %v782
    %851 = vmatpush.bf16.msra.mxu0 %v815
    %852 = vmatpush.bf16.msra.mxu0 %v811
    %853 = vmatpush.bf16.msra.mxu0 %v807
    %854 = vmatpush.bf16.msra.mxu0 %v803
    %855 = vmatpush.bf16.msra.mxu0 %v799
    %856 = vmatpush.bf16.msra.mxu0 %v795
    %857 = vmatpush.bf16.msra.mxu0 %v791
    %858 = vmatpush.bf16.msra.mxu0 %v787
    %859 = vmatmul.bf16.gmra.mxu0 %v658
    %v860 = vpop.f32.mrf.mxu0
    %v861 = vadd.f32 0.0, %v860
    %v862 = vpop.f32.mrf.mxu0
    %v863 = vadd.f32 0.0, %v862
    %864 = vdwg.mxu0
    %865 = vmatpush.bf16.msra.mxu0 %v816
    %866 = vmatpush.bf16.msra.mxu0 %v812
    %867 = vmatpush.bf16.msra.mxu0 %v808
    %868 = vmatpush.bf16.msra.mxu0 %v804
    %869 = vmatpush.bf16.msra.mxu0 %v800
    %870 = vmatpush.bf16.msra.mxu0 %v796
    %871 = vmatpush.bf16.msra.mxu0 %v792
    %872 = vmatpush.bf16.msra.mxu0 %v788
    %873 = vmatmul.bf16.gmra.mxu0 %v658
    %v874 = vpop.f32.mrf.mxu0
    %v875 = vadd.f32 0.0, %v874
    %v876 = vpop.f32.mrf.mxu0
    %v877 = vadd.f32 0.0, %v876
    %878 = vdwg.mxu0
    %879 = vmatpush.bf16.msra.mxu0 %v817
    %880 = vmatpush.bf16.msra.mxu0 %v813
    %881 = vmatpush.bf16.msra.mxu0 %v809
    %882 = vmatpush.bf16.msra.mxu0 %v805
    %883 = vmatpush.bf16.msra.mxu0 %v801
    %884 = vmatpush.bf16.msra.mxu0 %v797
    %885 = vmatpush.bf16.msra.mxu0 %v793
    %886 = vmatpush.bf16.msra.mxu0 %v789
    %887 = vmatmul.bf16.gmra.mxu0 %v658
    %v888 = vpop.f32.mrf.mxu0
    %v889 = vadd.f32 0.0, %v888
    %v890 = vpop.f32.mrf.mxu0
    %v891 = vadd.f32 0.0, %v890
    %892 = vdwg.mxu0
    %893 = vmatpush.bf16.msra.mxu0 %v818
    %894 = vmatpush.bf16.msra.mxu0 %v814
    %895 = vmatpush.bf16.msra.mxu0 %v810
    %896 = vmatpush.bf16.msra.mxu0 %v806
    %897 = vmatpush.bf16.msra.mxu0 %v802
    %898 = vmatpush.bf16.msra.mxu0 %v798
    %899 = vmatpush.bf16.msra.mxu0 %v794
    %900 = vmatpush.bf16.msra.mxu0 %v790
    %901 = vmatmul.bf16.gmra.mxu0 %v658
    %v902 = vpop.f32.mrf.mxu0
    %v903 = vadd.f32 0.0, %v902
    %v904 = vpop.f32.mrf.mxu0
    %v905 = vadd.f32 0.0, %v904
    %906 = vdwg.mxu0
    %v907 = vxor.u32 %v861, 2147483648
    %v908 = vxor.u32 %v875, 2147483648
    %v909 = vxor.u32 %v863, 2147483648
    %v910 = vxor.u32 %v877, 2147483648
    %v911 = vmul.f32 %v907, 1.442695
    %v912 = vpow.pop %v911
    %v913 = vmul.f32 %v908, 1.442695
    %v914 = vpow.pop %v913
    %v915 = vmul.f32 %v909, 1.442695
    %v916 = vpow.pop %v915
    %v917 = vmul.f32 %v910, 1.442695
    %v918 = vpow.pop %v917
    %v919 = vadd.f32 %v912, 1.0
    %v920 = vadd.f32 %v914, 1.0
    %v921 = vadd.f32 %v916, 1.0
    %v922 = vadd.f32 %v918, 1.0
    %v923 = vrcp.pop %v919
    %v924 = vmul.f32 %v919, %v923
    %v925 = vsub.f32 1.0, %v924
    %v926 = vmul.f32 %v923, %v925
    %v927 = vadd.f32 %v923, %v926
    %vm928 = vweird.f32 %v919
    %vm929 = vweird.f32 %v923
    %vm930 = vmor %vm928, %vm929
    %v931 = vsel %vm930, %v923, %v927
    %v932 = vand.u32 2147483647, %v919
    %vm933 = vcmp.eq.f32.partialorder %v932, 8.507059e+37
    %v934 = vand.u32 %v919, 2147483648
    %v935 = vor.u32 1.1754944e-38, %v934
    %v936 = vsel %vm933, %v935, %v931
    %v937 = vmul.f32 1.0, %v936
    %v938 = vrcp.pop %v920
    %v939 = vmul.f32 %v920, %v938
    %v940 = vsub.f32 1.0, %v939
    %v941 = vmul.f32 %v938, %v940
    %v942 = vadd.f32 %v938, %v941
    %vm943 = vweird.f32 %v920
    %vm944 = vweird.f32 %v938
    %vm945 = vmor %vm943, %vm944
    %v946 = vsel %vm945, %v938, %v942
    %v947 = vand.u32 2147483647, %v920
    %vm948 = vcmp.eq.f32.partialorder %v947, 8.507059e+37
    %v949 = vand.u32 %v920, 2147483648
    %v950 = vor.u32 1.1754944e-38, %v949
    %v951 = vsel %vm948, %v950, %v946
    %v952 = vmul.f32 1.0, %v951
    %v953 = vrcp.pop %v921
    %v954 = vmul.f32 %v921, %v953
    %v955 = vsub.f32 1.0, %v954
    %v956 = vmul.f32 %v953, %v955
    %v957 = vadd.f32 %v953, %v956
    %vm958 = vweird.f32 %v921
    %vm959 = vweird.f32 %v953
    %vm960 = vmor %vm958, %vm959
    %v961 = vsel %vm960, %v953, %v957
    %v962 = vand.u32 2147483647, %v921
    %vm963 = vcmp.eq.f32.partialorder %v962, 8.507059e+37
    %v964 = vand.u32 %v921, 2147483648
    %v965 = vor.u32 1.1754944e-38, %v964
    %v966 = vsel %vm963, %v965, %v961
    %v967 = vmul.f32 1.0, %v966
    %v968 = vrcp.pop %v922
    %v969 = vmul.f32 %v922, %v968
    %v970 = vsub.f32 1.0, %v969
    %v971 = vmul.f32 %v968, %v970
    %v972 = vadd.f32 %v968, %v971
    %vm973 = vweird.f32 %v922
    %vm974 = vweird.f32 %v968
    %vm975 = vmor %vm973, %vm974
    %v976 = vsel %vm975, %v968, %v972
    %v977 = vand.u32 2147483647, %v922
    %vm978 = vcmp.eq.f32.partialorder %v977, 8.507059e+37
    %v979 = vand.u32 %v922, 2147483648
    %v980 = vor.u32 1.1754944e-38, %v979
    %v981 = vsel %vm978, %v980, %v976
    %v982 = vmul.f32 1.0, %v981
    %v983 = vmul.f32 %v861, %v937
    %v984 = vmul.f32 %v875, %v952
    %v985 = vmul.f32 %v863, %v967
    %v986 = vmul.f32 %v877, %v982
    %v987 = vmul.f32 %v983, %v889
    %v988 = vmul.f32 %v984, %v903
    %v989 = vmul.f32 %v985, %v891
    %v990 = vmul.f32 %v986, %v905
    %v991 = vpack.c.bf16 %v989, %v987
    %v992 = vpack.c.bf16 %v990, %v988
    %v993 = vld [vmem:[#allocation12] sm:$0xf]
    %v994 = vld [vmem:[#allocation12 + $0x4] sm:$0xf]
    %v995 = vld [vmem:[#allocation12 + $0x8] sm:$0xf]
    %v996 = vld [vmem:[#allocation12 + $0xc] sm:$0xf]
    %v997 = vld [vmem:[#allocation12 + $0x10] sm:$0xf]
    %v998 = vld [vmem:[#allocation12 + $0x14] sm:$0xf]
    %v999 = vld [vmem:[#allocation12 + $0x18] sm:$0xf]
    %v1000 = vld [vmem:[#allocation12 + $0x1c] sm:$0xf]
    %v1001 = vld [vmem:[#allocation12 + $0x20] sm:$0xf]
    %v1002 = vld [vmem:[#allocation12 + $0x24] sm:$0xf]
    %v1003 = vld [vmem:[#allocation12 + $0x28] sm:$0xf]
    %v1004 = vld [vmem:[#allocation12 + $0x2c] sm:$0xf]
    %v1005 = vld [vmem:[#allocation12 + $0x30] sm:$0xf]
    %v1006 = vld [vmem:[#allocation12 + $0x34] sm:$0xf]
    %v1007 = vld [vmem:[#allocation12 + $0x38] sm:$0xf]
    %v1008 = vld [vmem:[#allocation12 + $0x3c] sm:$0xf]
    %v1009 = vld [vmem:[#allocation12 + $0x40] sm:$0xf]
    %v1010 = vld [vmem:[#allocation12 + $0x44] sm:$0xf]
    %v1011 = vld [vmem:[#allocation12 + $0x48] sm:$0xf]
    %v1012 = vld [vmem:[#allocation12 + $0x4c] sm:$0xf]
    %v1013 = vld [vmem:[#allocation12 + $0x50] sm:$0xf]
    %v1014 = vld [vmem:[#allocation12 + $0x54] sm:$0xf]
    %v1015 = vld [vmem:[#allocation12 + $0x58] sm:$0xf]
    %v1016 = vld [vmem:[#allocation12 + $0x5c] sm:$0xf]
    %v1017 = vld [vmem:[#allocation12 + $0x60] sm:$0xf]
    %v1018 = vld [vmem:[#allocation12 + $0x64] sm:$0xf]
    %v1019 = vld [vmem:[#allocation12 + $0x68] sm:$0xf]
    %v1020 = vld [vmem:[#allocation12 + $0x6c] sm:$0xf]
    %v1021 = vld [vmem:[#allocation12 + $0x70] sm:$0xf]
    %v1022 = vld [vmem:[#allocation12 + $0x74] sm:$0xf]
    %v1023 = vld [vmem:[#allocation12 + $0x78] sm:$0xf]
    %v1024 = vld [vmem:[#allocation12 + $0x7c] sm:$0xf]
    %v1057 = vunpack.c.l.b16 %v993
    %v1058 = vunpack.c.l.b16 %v994
    %v1059 = vunpack.c.l.b16 %v995
    %v1060 = vunpack.c.l.b16 %v996
    %v1061 = vunpack.c.l.b16 %v997
    %v1062 = vunpack.c.l.b16 %v998
    %v1063 = vunpack.c.l.b16 %v999
    %v1064 = vunpack.c.l.b16 %v1000
    %v1065 = vunpack.c.l.b16 %v1001
    %v1066 = vunpack.c.l.b16 %v1002
    %v1067 = vunpack.c.l.b16 %v1003
    %v1068 = vunpack.c.l.b16 %v1004
    %v1069 = vunpack.c.l.b16 %v1005
    %v1070 = vunpack.c.l.b16 %v1006
    %v1071 = vunpack.c.l.b16 %v1007
    %v1072 = vunpack.c.l.b16 %v1008
    %v1073 = vunpack.c.l.b16 %v1009
    %v1074 = vunpack.c.l.b16 %v1010
    %v1075 = vunpack.c.l.b16 %v1011
    %v1076 = vunpack.c.l.b16 %v1012
    %v1077 = vunpack.c.l.b16 %v1013
    %v1078 = vunpack.c.l.b16 %v1014
    %v1079 = vunpack.c.l.b16 %v1015
    %v1080 = vunpack.c.l.b16 %v1016
    %v1081 = vunpack.c.l.b16 %v1017
    %v1082 = vunpack.c.l.b16 %v1018
    %v1083 = vunpack.c.l.b16 %v1019
    %v1084 = vunpack.c.l.b16 %v1020
    %v1085 = vunpack.c.l.b16 %v1021
    %v1086 = vunpack.c.l.b16 %v1022
    %v1087 = vunpack.c.l.b16 %v1023
    %v1088 = vunpack.c.l.b16 %v1024
    %v1089 = vpack.c.b16 %v1058, %v1057
    %v1090 = vpack.c.b16 %v1060, %v1059
    %v1091 = vpack.c.b16 %v1062, %v1061
    %v1092 = vpack.c.b16 %v1064, %v1063
    %v1093 = vpack.c.b16 %v1066, %v1065
    %v1094 = vpack.c.b16 %v1068, %v1067
    %v1095 = vpack.c.b16 %v1070, %v1069
    %v1096 = vpack.c.b16 %v1072, %v1071
    %v1097 = vpack.c.b16 %v1074, %v1073
    %v1098 = vpack.c.b16 %v1076, %v1075
    %v1099 = vpack.c.b16 %v1078, %v1077
    %v1100 = vpack.c.b16 %v1080, %v1079
    %v1101 = vpack.c.b16 %v1082, %v1081
    %v1102 = vpack.c.b16 %v1084, %v1083
    %v1103 = vpack.c.b16 %v1086, %v1085
    %v1104 = vpack.c.b16 %v1088, %v1087
    %1121 = vmatpush.bf16.msra.mxu0 %v1096
    %1122 = vmatpush.bf16.msra.mxu0 %v1095
    %1123 = vmatpush.bf16.msra.mxu0 %v1094
    %1124 = vmatpush.bf16.msra.mxu0 %v1093
    %1125 = vmatpush.bf16.msra.mxu0 %v1092
    %1126 = vmatpush.bf16.msra.mxu0 %v1091
    %1127 = vmatpush.bf16.msra.mxu0 %v1090
    %1128 = vmatpush.bf16.msra.mxu0 %v1089
    %1129 = vmatmul.bf16.gmra.mxu0 %v991
    %v1130 = vpop.f32.mrf.mxu0
    %v1131 = vadd.f32 0.0, %v1130
    %v1132 = vpop.f32.mrf.mxu0
    %v1133 = vadd.f32 0.0, %v1132
    %1134 = vdwg.mxu0
    %1135 = vmatpush.bf16.msra.mxu0 %v1104
    %1136 = vmatpush.bf16.msra.mxu0 %v1103
    %1137 = vmatpush.bf16.msra.mxu0 %v1102
    %1138 = vmatpush.bf16.msra.mxu0 %v1101
    %1139 = vmatpush.bf16.msra.mxu0 %v1100
    %1140 = vmatpush.bf16.msra.mxu0 %v1099
    %1141 = vmatpush.bf16.msra.mxu0 %v1098
    %1142 = vmatpush.bf16.msra.mxu0 %v1097
    %1143 = vmatmul.bf16.gmra.mxu0 %v992
    %v1144 = vpop.f32.mrf.mxu0
    %v1145 = vadd.f32 %v1131, %v1144
    %v1146 = vpop.f32.mrf.mxu0
    %v1147 = vadd.f32 %v1133, %v1146
    %1148 = vdwg.mxu0
    %v1149 = vadd.f32 %v618, %v1145
    %v1150 = vadd.f32 %v619, %v1147
    %s1151 = scalar_lea.vmem [#allocation6], 1
    %v1152 = vld [vmem:[%s1151] sm:$0x1]
    %v1153 = vmul.f32 %v1149, %v1149
    %v1154 = vmul.f32 %v1150, %v1150
    %1155 = vadd.xlane.f32.xlu0 %v1153
    %v1156 = vpop.xlane.xlu0 %1155
    %1157 = vadd.xlane.f32.xlu0 %v1154
    %v1158 = vpop.xlane.xlu0 %1157
    %v1159 = vmul.f32 %v1156, %v166
    %v1160 = vmul.f32 %v1158, %v166
    %v1161 = vadd.f32 %v1159, 1e-06
    %v1162 = vadd.f32 %v1160, 1e-06
    %v1163 = vrsqrt.pop %v1161
    %v1164 = vmul.f32 %v1163, %v1161
    %v1165 = vmul.f32 %v1164, %v1163
    %v1166 = vmul.f32 0.5, %v1165
    %v1167 = vsub.f32 1.5, %v1166
    %v1168 = vmul.f32 %v1163, %v1167
    %vm1169 = vweird.f32 %v1161
    %vm1170 = vweird.f32 %v1163
    %vm1171 = vmor %vm1169, %vm1170
    %v1172 = vsel %vm1171, %v1163, %v1168
    %v1173 = vrsqrt.pop %v1162
    %v1174 = vmul.f32 %v1173, %v1162
    %v1175 = vmul.f32 %v1174, %v1173
    %v1176 = vmul.f32 0.5, %v1175
    %v1177 = vsub.f32 1.5, %v1176
    %v1178 = vmul.f32 %v1173, %v1177
    %vm1179 = vweird.f32 %v1162
    %vm1180 = vweird.f32 %v1173
    %vm1181 = vmor %vm1179, %vm1180
    %v1182 = vsel %vm1181, %v1173, %v1178
    %v1183 = vmul.f32 %v1149, %v1172
    %v1184 = vmul.f32 %v1150, %v1182
    %v1186 = vperm.slane %v1152, 0
    %v1188 = vmul.f32 %v1183, %v1186
    %v1189 = vmul.f32 %v1184, %v1186
    %v1190 = vpack.c.bf16 %v1189, %v1188
    %s1191 = scalar_lea.vmem [#allocation8], 192
    %v1192 = vld [vmem:[%s1191] sm:$0xff]
    %v1193 = vld [vmem:[%s1191 + $0x8] sm:$0xf]
    %v1194 = vld [vmem:[%s1191 + $0xc] sm:$0xff]
    %v1195 = vld [vmem:[%s1191 + $0x14] sm:$0xf]
    %v1196 = vld [vmem:[%s1191 + $0x18] sm:$0xff]
    %v1197 = vld [vmem:[%s1191 + $0x20] sm:$0xf]
    %v1198 = vld [vmem:[%s1191 + $0x24] sm:$0xff]
    %v1199 = vld [vmem:[%s1191 + $0x2c] sm:$0xf]
    %v1200 = vld [vmem:[%s1191 + $0x30] sm:$0xff]
    %v1201 = vld [vmem:[%s1191 + $0x38] sm:$0xf]
    %v1202 = vld [vmem:[%s1191 + $0x3c] sm:$0xff]
    %v1203 = vld [vmem:[%s1191 + $0x44] sm:$0xf]
    %v1204 = vld [vmem:[%s1191 + $0x48] sm:$0xff]
    %v1205 = vld [vmem:[%s1191 + $0x50] sm:$0xf]
    %v1206 = vld [vmem:[%s1191 + $0x54] sm:$0xff]
    %v1207 = vld [vmem:[%s1191 + $0x5c] sm:$0xf]
    %v1208 = vld [vmem:[%s1191 + $0x60] sm:$0xff]
    %v1209 = vld [vmem:[%s1191 + $0x68] sm:$0xf]
    %v1210 = vld [vmem:[%s1191 + $0x6c] sm:$0xff]
    %v1211 = vld [vmem:[%s1191 + $0x74] sm:$0xf]
    %v1212 = vld [vmem:[%s1191 + $0x78] sm:$0xff]
    %v1213 = vld [vmem:[%s1191 + $0x80] sm:$0xf]
    %v1214 = vld [vmem:[%s1191 + $0x84] sm:$0xff]
    %v1215 = vld [vmem:[%s1191 + $0x8c] sm:$0xf]
    %v1216 = vld [vmem:[%s1191 + $0x90] sm:$0xff]
    %v1217 = vld [vmem:[%s1191 + $0x98] sm:$0xf]
    %v1218 = vld [vmem:[%s1191 + $0x9c] sm:$0xff]
    %v1219 = vld [vmem:[%s1191 + $0xa4] sm:$0xf]
    %v1220 = vld [vmem:[%s1191 + $0xa8] sm:$0xff]
    %v1221 = vld [vmem:[%s1191 + $0xb0] sm:$0xf]
    %v1222 = vld [vmem:[%s1191 + $0xb4] sm:$0xff]
    %v1223 = vld [vmem:[%s1191 + $0xbc] sm:$0xf]
    %v1256 = vunpack.c.l.b16 %v1192
    %v1257 = vunpack.c.h.b16 %v1192
    %v1258 = vunpack.c.l.b16 %v1193
    %v1259 = vunpack.c.l.b16 %v1194
    %v1260 = vunpack.c.h.b16 %v1194
    %v1261 = vunpack.c.l.b16 %v1195
    %v1262 = vunpack.c.l.b16 %v1196
    %v1263 = vunpack.c.h.b16 %v1196
    %v1264 = vunpack.c.l.b16 %v1197
    %v1265 = vunpack.c.l.b16 %v1198
    %v1266 = vunpack.c.h.b16 %v1198
    %v1267 = vunpack.c.l.b16 %v1199
    %v1268 = vunpack.c.l.b16 %v1200
    %v1269 = vunpack.c.h.b16 %v1200
    %v1270 = vunpack.c.l.b16 %v1201
    %v1271 = vunpack.c.l.b16 %v1202
    %v1272 = vunpack.c.h.b16 %v1202
    %v1273 = vunpack.c.l.b16 %v1203
    %v1274 = vunpack.c.l.b16 %v1204
    %v1275 = vunpack.c.h.b16 %v1204
    %v1276 = vunpack.c.l.b16 %v1205
    %v1277 = vunpack.c.l.b16 %v1206
    %v1278 = vunpack.c.h.b16 %v1206
    %v1279 = vunpack.c.l.b16 %v1207
    %v1280 = vunpack.c.l.b16 %v1208
    %v1281 = vunpack.c.h.b16 %v1208
    %v1282 = vunpack.c.l.b16 %v1209
    %v1283 = vunpack.c.l.b16 %v1210
    %v1284 = vunpack.c.h.b16 %v1210
    %v1285 = vunpack.c.l.b16 %v1211
    %v1286 = vunpack.c.l.b16 %v1212
    %v1287 = vunpack.c.h.b16 %v1212
    %v1288 = vunpack.c.l.b16 %v1213
    %v1289 = vunpack.c.l.b16 %v1214
    %v1290 = vunpack.c.h.b16 %v1214
    %v1291 = vunpack.c.l.b16 %v1215
    %v1292 = vunpack.c.l.b16 %v1216
    %v1293 = vunpack.c.h.b16 %v1216
    %v1294 = vunpack.c.l.b16 %v1217
    %v1295 = vunpack.c.l.b16 %v1218
    %v1296 = vunpack.c.h.b16 %v1218
    %v1297 = vunpack.c.l.b16 %v1219
    %v1298 = vunpack.c.l.b16 %v1220
    %v1299 = vunpack.c.h.b16 %v1220
    %v1300 = vunpack.c.l.b16 %v1221
    %v1301 = vunpack.c.l.b16 %v1222
    %v1302 = vunpack.c.h.b16 %v1222
    %v1303 = vunpack.c.l.b16 %v1223
    %v1304 = vpack.c.b16 %v1259, %v1256
    %v1305 = vpack.c.b16 %v1260, %v1257
    %v1306 = vpack.c.b16 %v1261, %v1258
    %v1307 = vpack.c.b16 %v1265, %v1262
    %v1308 = vpack.c.b16 %v1266, %v1263
    %v1309 = vpack.c.b16 %v1267, %v1264
    %v1310 = vpack.c.b16 %v1271, %v1268
    %v1311 = vpack.c.b16 %v1272, %v1269
    %v1312 = vpack.c.b16 %v1273, %v1270
    %v1313 = vpack.c.b16 %v1277, %v1274
    %v1314 = vpack.c.b16 %v1278, %v1275
    %v1315 = vpack.c.b16 %v1279, %v1276
    %v1316 = vpack.c.b16 %v1283, %v1280
    %v1317 = vpack.c.b16 %v1284, %v1281
    %v1318 = vpack.c.b16 %v1285, %v1282
    %v1319 = vpack.c.b16 %v1289, %v1286
    %v1320 = vpack.c.b16 %v1290, %v1287
    %v1321 = vpack.c.b16 %v1291, %v1288
    %v1322 = vpack.c.b16 %v1295, %v1292
    %v1323 = vpack.c.b16 %v1296, %v1293
    %v1324 = vpack.c.b16 %v1297, %v1294
    %v1325 = vpack.c.b16 %v1301, %v1298
    %v1326 = vpack.c.b16 %v1302, %v1299
    %v1327 = vpack.c.b16 %v1303, %v1300
    %1352 = vmatpush.bf16.msra.mxu0 %v1325
    %1353 = vmatpush.bf16.msra.mxu0 %v1322
    %1354 = vmatpush.bf16.msra.mxu0 %v1319
    %1355 = vmatpush.bf16.msra.mxu0 %v1316
    %1356 = vmatpush.bf16.msra.mxu0 %v1313
    %1357 = vmatpush.bf16.msra.mxu0 %v1310
    %1358 = vmatpush.bf16.msra.mxu0 %v1307
    %1359 = vmatpush.bf16.msra.mxu0 %v1304
    %1360 = vmatmul.bf16.gmra.mxu0 %v1190
    %v1361 = vpop.f32.mrf.mxu0
    %v1362 = vadd.f32 0.0, %v1361
    %v1363 = vpop.f32.mrf.mxu0
    %v1364 = vadd.f32 0.0, %v1363
    %1365 = vdwg.mxu0
    %1366 = vmatpush.bf16.msra.mxu0 %v1326
    %1367 = vmatpush.bf16.msra.mxu0 %v1323
    %1368 = vmatpush.bf16.msra.mxu0 %v1320
    %1369 = vmatpush.bf16.msra.mxu0 %v1317
    %1370 = vmatpush.bf16.msra.mxu0 %v1314
    %1371 = vmatpush.bf16.msra.mxu0 %v1311
    %1372 = vmatpush.bf16.msra.mxu0 %v1308
    %1373 = vmatpush.bf16.msra.mxu0 %v1305
    %1374 = vmatmul.bf16.gmra.mxu0 %v1190
    %v1375 = vpop.f32.mrf.mxu0
    %v1376 = vadd.f32 0.0, %v1375
    %v1377 = vpop.f32.mrf.mxu0
    %v1378 = vadd.f32 0.0, %v1377
    %1379 = vdwg.mxu0
    %1380 = vmatpush.bf16.msra.mxu0 %v1327
    %1381 = vmatpush.bf16.msra.mxu0 %v1324
    %1382 = vmatpush.bf16.msra.mxu0 %v1321
    %1383 = vmatpush.bf16.msra.mxu0 %v1318
    %1384 = vmatpush.bf16.msra.mxu0 %v1315
    %1385 = vmatpush.bf16.msra.mxu0 %v1312
    %1386 = vmatpush.bf16.msra.mxu0 %v1309
    %1387 = vmatpush.bf16.msra.mxu0 %v1306
    %1388 = vmatmul.bf16.gmra.mxu0 %v1190
    %v1389 = vpop.f32.mrf.mxu0
    %v1390 = vadd.f32 0.0, %v1389
    %v1391 = vpop.f32.mrf.mxu0
    %v1392 = vadd.f32 0.0, %v1391
    %1393 = vdwg.mxu0
    %1394 = vmatpush.xpose.msra.mxu0 0.0
    %1395 = vmatpush.xpose.msra.mxu0 0.0
    %1396 = vmatpush.xpose.msra.mxu0 0.0
    %1397 = vmatpush.xpose.msra.mxu0 0.0
    %1398 = vmatpush.xpose.msra.mxu0 0.0
    %1399 = vmatpush.xpose.msra.mxu0 0.0
    %1400 = vmatpush.xpose.msra.mxu0 0.0
    %1401 = vmatpush.xpose.msra.mxu0 0.0
    %1402 = vmatpush.xpose.msra.mxu0 0.0
    %1403 = vmatpush.xpose.msra.mxu0 0.0
    %1404 = vmatpush.xpose.msra.mxu0 0.0
    %1405 = vmatpush.xpose.msra.mxu0 0.0
    %1406 = vmatpush.xpose.msra.mxu0 0.0
    %1407 = vmatpush.xpose.msra.mxu0 0.0
    %1408 = vmatpush.xpose.msra.mxu0 0.0
    %1409 = vmatpush.xpose.msra.mxu0 %v1376
    %1410 = vmatmul.f32.gmra.mxu0 %v1362
    %v1411 = vpop.f32.mrf.mxu0
    %v1412 = vadd.f32 %v401, %v1411
    %1413 = vdwg.mxu0
    %v1414 = vsel %vm422, %v1412, -inf
    %1415 = vmax.xlane.f32.xlu0 %v1414
    %v1416 = vpop.xlane.xlu0 %1415
    %v1417 = vsub.f32 %v1412, %v1416
    %v1418 = vmul.f32 %v1417, 1.442695
    %v1419 = vpow.pop %v1418
    %v1420 = vsel %vm422, %v1419, 0.0
    %1421 = vadd.xlane.f32.xlu0 %v1420
    %v1422 = vpop.xlane.xlu0 %1421
    %v1423 = vrcp.pop %v1422
    %v1424 = vmul.f32 %v1422, %v1423
    %v1425 = vsub.f32 1.0, %v1424
    %v1426 = vmul.f32 %v1423, %v1425
    %v1427 = vadd.f32 %v1423, %v1426
    %vm1428 = vweird.f32 %v1422
    %vm1429 = vweird.f32 %v1423
    %vm1430 = vmor %vm1428, %vm1429
    %v1431 = vsel %vm1430, %v1423, %v1427
    %v1432 = vand.u32 2147483647, %v1422
    %vm1433 = vcmp.eq.f32.partialorder %v1432, 8.507059e+37
    %v1434 = vand.u32 %v1422, 2147483648
    %v1435 = vor.u32 1.1754944e-38, %v1434
    %v1436 = vsel %vm1433, %v1435, %v1431
    %v1437 = vmul.f32 %v1419, %v1436
    %v1439 = vsel %vm422, %v1437, 0
    %1441 = vmatpush.msra.mxu0 0.0
    %1442 = vmatpush.msra.mxu0 0.0
    %1443 = vmatpush.msra.mxu0 0.0
    %1444 = vmatpush.msra.mxu0 0.0
    %1445 = vmatpush.msra.mxu0 0.0
    %1446 = vmatpush.msra.mxu0 0.0
    %1447 = vmatpush.msra.mxu0 0.0
    %1448 = vmatpush.msra.mxu0 0.0
    %1449 = vmatpush.msra.mxu0 0.0
    %1450 = vmatpush.msra.mxu0 0.0
    %1451 = vmatpush.msra.mxu0 0.0
    %1452 = vmatpush.msra.mxu0 0.0
    %1453 = vmatpush.msra.mxu0 0.0
    %1454 = vmatpush.msra.mxu0 0.0
    %1455 = vmatpush.msra.mxu0 0.0
    %1456 = vmatpush.msra.mxu0 %v1390
    %1457 = vmatmul.f32.gmra.mxu0 %v1439
    %v1458 = vpop.f32.mrf.mxu0
    %v1459 = vadd.f32 0.0, %v1458
    %1460 = vdwg.mxu0
    %1461 = vmatpush.xpose.msra.mxu0 0.0
    %1462 = vmatpush.xpose.msra.mxu0 0.0
    %1463 = vmatpush.xpose.msra.mxu0 0.0
    %1464 = vmatpush.xpose.msra.mxu0 0.0
    %1465 = vmatpush.xpose.msra.mxu0 0.0
    %1466 = vmatpush.xpose.msra.mxu0 0.0
    %1467 = vmatpush.xpose.msra.mxu0 0.0
    %1468 = vmatpush.xpose.msra.mxu0 0.0
    %1469 = vmatpush.xpose.msra.mxu0 0.0
    %1470 = vmatpush.xpose.msra.mxu0 0.0
    %1471 = vmatpush.xpose.msra.mxu0 0.0
    %1472 = vmatpush.xpose.msra.mxu0 0.0
    %1473 = vmatpush.xpose.msra.mxu0 0.0
    %1474 = vmatpush.xpose.msra.mxu0 0.0
    %1475 = vmatpush.xpose.msra.mxu0 0.0
    %1476 = vmatpush.xpose.msra.mxu0 %v1378
    %1477 = vmatmul.f32.gmra.mxu0 %v1364
    %v1478 = vpop.f32.mrf.mxu0
    %v1479 = vadd.f32 %v471, %v1478
    %1480 = vdwg.mxu0
    %v1481 = vsel %vm422, %v1479, -inf
    %1482 = vmax.xlane.f32.xlu0 %v1481
    %v1483 = vpop.xlane.xlu0 %1482
    %v1484 = vsub.f32 %v1479, %v1483
    %v1485 = vmul.f32 %v1484, 1.442695
    %v1486 = vpow.pop %v1485
    %v1487 = vsel %vm422, %v1486, 0.0
    %1488 = vadd.xlane.f32.xlu0 %v1487
    %v1489 = vpop.xlane.xlu0 %1488
    %v1490 = vrcp.pop %v1489
    %v1491 = vmul.f32 %v1489, %v1490
    %v1492 = vsub.f32 1.0, %v1491
    %v1493 = vmul.f32 %v1490, %v1492
    %v1494 = vadd.f32 %v1490, %v1493
    %vm1495 = vweird.f32 %v1489
    %vm1496 = vweird.f32 %v1490
    %vm1497 = vmor %vm1495, %vm1496
    %v1498 = vsel %vm1497, %v1490, %v1494
    %v1499 = vand.u32 2147483647, %v1489
    %vm1500 = vcmp.eq.f32.partialorder %v1499, 8.507059e+37
    %v1501 = vand.u32 %v1489, 2147483648
    %v1502 = vor.u32 1.1754944e-38, %v1501
    %v1503 = vsel %vm1500, %v1502, %v1498
    %v1504 = vmul.f32 %v1486, %v1503
    %v1506 = vsel %vm422, %v1504, 0
    %1508 = vmatpush.msra.mxu0 0.0
    %1509 = vmatpush.msra.mxu0 0.0
    %1510 = vmatpush.msra.mxu0 0.0
    %1511 = vmatpush.msra.mxu0 0.0
    %1512 = vmatpush.msra.mxu0 0.0
    %1513 = vmatpush.msra.mxu0 0.0
    %1514 = vmatpush.msra.mxu0 0.0
    %1515 = vmatpush.msra.mxu0 0.0
    %1516 = vmatpush.msra.mxu0 0.0
    %1517 = vmatpush.msra.mxu0 0.0
    %1518 = vmatpush.msra.mxu0 0.0
    %1519 = vmatpush.msra.mxu0 0.0
    %1520 = vmatpush.msra.mxu0 0.0
    %1521 = vmatpush.msra.mxu0 0.0
    %1522 = vmatpush.msra.mxu0 0.0
    %1523 = vmatpush.msra.mxu0 %v1392
    %1524 = vmatmul.f32.gmra.mxu0 %v1506
    %v1525 = vpop.f32.mrf.mxu0
    %v1526 = vadd.f32 0.0, %v1525
    %1527 = vdwg.mxu0
    %v1528 = vpack.c.bf16 %v1526, %v1459
    %s1529 = scalar_lea.vmem [#allocation9], 64
    %v1530 = vld [vmem:[%s1529] sm:$0xf]
    %v1531 = vld [vmem:[%s1529 + $0x4] sm:$0xf]
    %v1532 = vld [vmem:[%s1529 + $0x8] sm:$0xf]
    %v1533 = vld [vmem:[%s1529 + $0xc] sm:$0xf]
    %v1534 = vld [vmem:[%s1529 + $0x10] sm:$0xf]
    %v1535 = vld [vmem:[%s1529 + $0x14] sm:$0xf]
    %v1536 = vld [vmem:[%s1529 + $0x18] sm:$0xf]
    %v1537 = vld [vmem:[%s1529 + $0x1c] sm:$0xf]
    %v1538 = vld [vmem:[%s1529 + $0x20] sm:$0xf]
    %v1539 = vld [vmem:[%s1529 + $0x24] sm:$0xf]
    %v1540 = vld [vmem:[%s1529 + $0x28] sm:$0xf]
    %v1541 = vld [vmem:[%s1529 + $0x2c] sm:$0xf]
    %v1542 = vld [vmem:[%s1529 + $0x30] sm:$0xf]
    %v1543 = vld [vmem:[%s1529 + $0x34] sm:$0xf]
    %v1544 = vld [vmem:[%s1529 + $0x38] sm:$0xf]
    %v1545 = vld [vmem:[%s1529 + $0x3c] sm:$0xf]
    %v1562 = vunpack.c.l.b16 %v1530
    %v1563 = vunpack.c.l.b16 %v1531
    %v1564 = vunpack.c.l.b16 %v1532
    %v1565 = vunpack.c.l.b16 %v1533
    %v1566 = vunpack.c.l.b16 %v1534
    %v1567 = vunpack.c.l.b16 %v1535
    %v1568 = vunpack.c.l.b16 %v1536
    %v1569 = vunpack.c.l.b16 %v1537
    %v1570 = vunpack.c.l.b16 %v1538
    %v1571 = vunpack.c.l.b16 %v1539
    %v1572 = vunpack.c.l.b16 %v1540
    %v1573 = vunpack.c.l.b16 %v1541
    %v1574 = vunpack.c.l.b16 %v1542
    %v1575 = vunpack.c.l.b16 %v1543
    %v1576 = vunpack.c.l.b16 %v1544
    %v1577 = vunpack.c.l.b16 %v1545
    %v1578 = vpack.c.b16 %v1563, %v1562
    %v1579 = vpack.c.b16 %v1565, %v1564
    %v1580 = vpack.c.b16 %v1567, %v1566
    %v1581 = vpack.c.b16 %v1569, %v1568
    %v1582 = vpack.c.b16 %v1571, %v1570
    %v1583 = vpack.c.b16 %v1573, %v1572
    %v1584 = vpack.c.b16 %v1575, %v1574
    %v1585 = vpack.c.b16 %v1577, %v1576
    %1594 = vmatpush.bf16.msra.mxu0 %v1585
    %1595 = vmatpush.bf16.msra.mxu0 %v1584
    %1596 = vmatpush.bf16.msra.mxu0 %v1583
    %1597 = vmatpush.bf16.msra.mxu0 %v1582
    %1598 = vmatpush.bf16.msra.mxu0 %v1581
    %1599 = vmatpush.bf16.msra.mxu0 %v1580
    %1600 = vmatpush.bf16.msra.mxu0 %v1579
    %1601 = vmatpush.bf16.msra.mxu0 %v1578
    %1602 = vmatmul.bf16.gmra.mxu0 %v1528
    %v1603 = vpop.f32.mrf.mxu0
    %v1604 = vadd.f32 0.0, %v1603
    %v1605 = vpop.f32.mrf.mxu0
    %v1606 = vadd.f32 0.0, %v1605
    %1607 = vdwg.mxu0
    %v1608 = vadd.f32 %v1149, %v1604
    %v1609 = vadd.f32 %v1150, %v1606
    %s1610 = scalar_lea.vmem %s6, 1
    %v1611 = vld [vmem:[%s1610] sm:$0x1]
    %v1612 = vmul.f32 %v1608, %v1608
    %v1613 = vmul.f32 %v1609, %v1609
    %1614 = vadd.xlane.f32.xlu0 %v1612
    %v1615 = vpop.xlane.xlu0 %1614
    %1616 = vadd.xlane.f32.xlu0 %v1613
    %v1617 = vpop.xlane.xlu0 %1616
    %v1618 = vmul.f32 %v1615, %v166
    %v1619 = vmul.f32 %v1617, %v166
    %v1620 = vadd.f32 %v1618, 1e-06
    %v1621 = vadd.f32 %v1619, 1e-06
    %v1622 = vrsqrt.pop %v1620
    %v1623 = vmul.f32 %v1622, %v1620
    %v1624 = vmul.f32 %v1623, %v1622
    %v1625 = vmul.f32 0.5, %v1624
    %v1626 = vsub.f32 1.5, %v1625
    %v1627 = vmul.f32 %v1622, %v1626
    %vm1628 = vweird.f32 %v1620
    %vm1629 = vweird.f32 %v1622
    %vm1630 = vmor %vm1628, %vm1629
    %v1631 = vsel %vm1630, %v1622, %v1627
    %v1632 = vrsqrt.pop %v1621
    %v1633 = vmul.f32 %v1632, %v1621
    %v1634 = vmul.f32 %v1633, %v1632
    %v1635 = vmul.f32 0.5, %v1634
    %v1636 = vsub.f32 1.5, %v1635
    %v1637 = vmul.f32 %v1632, %v1636
    %vm1638 = vweird.f32 %v1621
    %vm1639 = vweird.f32 %v1632
    %vm1640 = vmor %vm1638, %vm1639
    %v1641 = vsel %vm1640, %v1632, %v1637
    %v1642 = vmul.f32 %v1608, %v1631
    %v1643 = vmul.f32 %v1609, %v1641
    %v1645 = vperm.slane %v1611, 0
    %v1647 = vmul.f32 %v1642, %v1645
    %v1648 = vmul.f32 %v1643, %v1645
    %v1649 = vpack.c.bf16 %v1648, %v1647
    %s1650 = scalar_lea.vmem [#allocation11], 256
    %v1651 = vld [vmem:[%s1650] sm:$0xff]
    %v1652 = vld [vmem:[%s1650 + $0x8] sm:$0xff]
    %v1653 = vld [vmem:[%s1650 + $0x10] sm:$0xff]
    %v1654 = vld [vmem:[%s1650 + $0x18] sm:$0xff]
    %v1655 = vld [vmem:[%s1650 + $0x20] sm:$0xff]
    %v1656 = vld [vmem:[%s1650 + $0x28] sm:$0xff]
    %v1657 = vld [vmem:[%s1650 + $0x30] sm:$0xff]
    %v1658 = vld [vmem:[%s1650 + $0x38] sm:$0xff]
    %v1659 = vld [vmem:[%s1650 + $0x40] sm:$0xff]
    %v1660 = vld [vmem:[%s1650 + $0x48] sm:$0xff]
    %v1661 = vld [vmem:[%s1650 + $0x50] sm:$0xff]
    %v1662 = vld [vmem:[%s1650 + $0x58] sm:$0xff]
    %v1663 = vld [vmem:[%s1650 + $0x60] sm:$0xff]
    %v1664 = vld [vmem:[%s1650 + $0x68] sm:$0xff]
    %v1665 = vld [vmem:[%s1650 + $0x70] sm:$0xff]
    %v1666 = vld [vmem:[%s1650 + $0x78] sm:$0xff]
    %v1667 = vld [vmem:[%s1650 + $0x80] sm:$0xff]
    %v1668 = vld [vmem:[%s1650 + $0x88] sm:$0xff]
    %v1669 = vld [vmem:[%s1650 + $0x90] sm:$0xff]
    %v1670 = vld [vmem:[%s1650 + $0x98] sm:$0xff]
    %v1671 = vld [vmem:[%s1650 + $0xa0] sm:$0xff]
    %v1672 = vld [vmem:[%s1650 + $0xa8] sm:$0xff]
    %v1673 = vld [vmem:[%s1650 + $0xb0] sm:$0xff]
    %v1674 = vld [vmem:[%s1650 + $0xb8] sm:$0xff]
    %v1675 = vld [vmem:[%s1650 + $0xc0] sm:$0xff]
    %v1676 = vld [vmem:[%s1650 + $0xc8] sm:$0xff]
    %v1677 = vld [vmem:[%s1650 + $0xd0] sm:$0xff]
    %v1678 = vld [vmem:[%s1650 + $0xd8] sm:$0xff]
    %v1679 = vld [vmem:[%s1650 + $0xe0] sm:$0xff]
    %v1680 = vld [vmem:[%s1650 + $0xe8] sm:$0xff]
    %v1681 = vld [vmem:[%s1650 + $0xf0] sm:$0xff]
    %v1682 = vld [vmem:[%s1650 + $0xf8] sm:$0xff]
    %v1715 = vunpack.c.l.b16 %v1651
    %v1716 = vunpack.c.h.b16 %v1651
    %v1717 = vunpack.c.l.b16 %v1652
    %v1718 = vunpack.c.h.b16 %v1652
    %v1719 = vunpack.c.l.b16 %v1653
    %v1720 = vunpack.c.h.b16 %v1653
    %v1721 = vunpack.c.l.b16 %v1654
    %v1722 = vunpack.c.h.b16 %v1654
    %v1723 = vunpack.c.l.b16 %v1655
    %v1724 = vunpack.c.h.b16 %v1655
    %v1725 = vunpack.c.l.b16 %v1656
    %v1726 = vunpack.c.h.b16 %v1656
    %v1727 = vunpack.c.l.b16 %v1657
    %v1728 = vunpack.c.h.b16 %v1657
    %v1729 = vunpack.c.l.b16 %v1658
    %v1730 = vunpack.c.h.b16 %v1658
    %v1731 = vunpack.c.l.b16 %v1659
    %v1732 = vunpack.c.h.b16 %v1659
    %v1733 = vunpack.c.l.b16 %v1660
    %v1734 = vunpack.c.h.b16 %v1660
    %v1735 = vunpack.c.l.b16 %v1661
    %v1736 = vunpack.c.h.b16 %v1661
    %v1737 = vunpack.c.l.b16 %v1662
    %v1738 = vunpack.c.h.b16 %v1662
    %v1739 = vunpack.c.l.b16 %v1663
    %v1740 = vunpack.c.h.b16 %v1663
    %v1741 = vunpack.c.l.b16 %v1664
    %v1742 = vunpack.c.h.b16 %v1664
    %v1743 = vunpack.c.l.b16 %v1665
    %v1744 = vunpack.c.h.b16 %v1665
    %v1745 = vunpack.c.l.b16 %v1666
    %v1746 = vunpack.c.h.b16 %v1666
    %v1747 = vunpack.c.l.b16 %v1667
    %v1748 = vunpack.c.h.b16 %v1667
    %v1749 = vunpack.c.l.b16 %v1668
    %v1750 = vunpack.c.h.b16 %v1668
    %v1751 = vunpack.c.l.b16 %v1669
    %v1752 = vunpack.c.h.b16 %v1669
    %v1753 = vunpack.c.l.b16 %v1670
    %v1754 = vunpack.c.h.b16 %v1670
    %v1755 = vunpack.c.l.b16 %v1671
    %v1756 = vunpack.c.h.b16 %v1671
    %v1757 = vunpack.c.l.b16 %v1672
    %v1758 = vunpack.c.h.b16 %v1672
    %v1759 = vunpack.c.l.b16 %v1673
    %v1760 = vunpack.c.h.b16 %v1673
    %v1761 = vunpack.c.l.b16 %v1674
    %v1762 = vunpack.c.h.b16 %v1674
    %v1763 = vunpack.c.l.b16 %v1675
    %v1764 = vunpack.c.h.b16 %v1675
    %v1765 = vunpack.c.l.b16 %v1676
    %v1766 = vunpack.c.h.b16 %v1676
    %v1767 = vunpack.c.l.b16 %v1677
    %v1768 = vunpack.c.h.b16 %v1677
    %v1769 = vunpack.c.l.b16 %v1678
    %v1770 = vunpack.c.h.b16 %v1678
    %v1771 = vunpack.c.l.b16 %v1679
    %v1772 = vunpack.c.h.b16 %v1679
    %v1773 = vunpack.c.l.b16 %v1680
    %v1774 = vunpack.c.h.b16 %v1680
    %v1775 = vunpack.c.l.b16 %v1681
    %v1776 = vunpack.c.h.b16 %v1681
    %v1777 = vunpack.c.l.b16 %v1682
    %v1778 = vunpack.c.h.b16 %v1682
    %v1779 = vpack.c.b16 %v1719, %v1715
    %v1780 = vpack.c.b16 %v1720, %v1716
    %v1781 = vpack.c.b16 %v1721, %v1717
    %v1782 = vpack.c.b16 %v1722, %v1718
    %v1783 = vpack.c.b16 %v1727, %v1723
    %v1784 = vpack.c.b16 %v1728, %v1724
    %v1785 = vpack.c.b16 %v1729, %v1725
    %v1786 = vpack.c.b16 %v1730, %v1726
    %v1787 = vpack.c.b16 %v1735, %v1731
    %v1788 = vpack.c.b16 %v1736, %v1732
    %v1789 = vpack.c.b16 %v1737, %v1733
    %v1790 = vpack.c.b16 %v1738, %v1734
    %v1791 = vpack.c.b16 %v1743, %v1739
    %v1792 = vpack.c.b16 %v1744, %v1740
    %v1793 = vpack.c.b16 %v1745, %v1741
    %v1794 = vpack.c.b16 %v1746, %v1742
    %v1795 = vpack.c.b16 %v1751, %v1747
    %v1796 = vpack.c.b16 %v1752, %v1748
    %v1797 = vpack.c.b16 %v1753, %v1749
    %v1798 = vpack.c.b16 %v1754, %v1750
    %v1799 = vpack.c.b16 %v1759, %v1755
    %v1800 = vpack.c.b16 %v1760, %v1756
    %v1801 = vpack.c.b16 %v1761, %v1757
    %v1802 = vpack.c.b16 %v1762, %v1758
    %v1803 = vpack.c.b16 %v1767, %v1763
    %v1804 = vpack.c.b16 %v1768, %v1764
    %v1805 = vpack.c.b16 %v1769, %v1765
    %v1806 = vpack.c.b16 %v1770, %v1766
    %v1807 = vpack.c.b16 %v1775, %v1771
    %v1808 = vpack.c.b16 %v1776, %v1772
    %v1809 = vpack.c.b16 %v1777, %v1773
    %v1810 = vpack.c.b16 %v1778, %v1774
    %1843 = vmatpush.bf16.msra.mxu0 %v1807
    %1844 = vmatpush.bf16.msra.mxu0 %v1803
    %1845 = vmatpush.bf16.msra.mxu0 %v1799
    %1846 = vmatpush.bf16.msra.mxu0 %v1795
    %1847 = vmatpush.bf16.msra.mxu0 %v1791
    %1848 = vmatpush.bf16.msra.mxu0 %v1787
    %1849 = vmatpush.bf16.msra.mxu0 %v1783
    %1850 = vmatpush.bf16.msra.mxu0 %v1779
    %1851 = vmatmul.bf16.gmra.mxu0 %v1649
    %v1852 = vpop.f32.mrf.mxu0
    %v1853 = vadd.f32 0.0, %v1852
    %v1854 = vpop.f32.mrf.mxu0
    %v1855 = vadd.f32 0.0, %v1854
    %1856 = vdwg.mxu0
    %1857 = vmatpush.bf16.msra.mxu0 %v1808
    %1858 = vmatpush.bf16.msra.mxu0 %v1804
    %1859 = vmatpush.bf16.msra.mxu0 %v1800
    %1860 = vmatpush.bf16.msra.mxu0 %v1796
    %1861 = vmatpush.bf16.msra.mxu0 %v1792
    %1862 = vmatpush.bf16.msra.mxu0 %v1788
    %1863 = vmatpush.bf16.msra.mxu0 %v1784
    %1864 = vmatpush.bf16.msra.mxu0 %v1780
    %1865 = vmatmul.bf16.gmra.mxu0 %v1649
    %v1866 = vpop.f32.mrf.mxu0
    %v1867 = vadd.f32 0.0, %v1866
    %v1868 = vpop.f32.mrf.mxu0
    %v1869 = vadd.f32 0.0, %v1868
    %1870 = vdwg.mxu0
    %1871 = vmatpush.bf16.msra.mxu0 %v1809
    %1872 = vmatpush.bf16.msra.mxu0 %v1805
    %1873 = vmatpush.bf16.msra.mxu0 %v1801
    %1874 = vmatpush.bf16.msra.mxu0 %v1797
    %1875 = vmatpush.bf16.msra.mxu0 %v1793
    %1876 = vmatpush.bf16.msra.mxu0 %v1789
    %1877 = vmatpush.bf16.msra.mxu0 %v1785
    %1878 = vmatpush.bf16.msra.mxu0 %v1781
    %1879 = vmatmul.bf16.gmra.mxu0 %v1649
    %v1880 = vpop.f32.mrf.mxu0
    %v1881 = vadd.f32 0.0, %v1880
    %v1882 = vpop.f32.mrf.mxu0
    %v1883 = vadd.f32 0.0, %v1882
    %1884 = vdwg.mxu0
    %1885 = vmatpush.bf16.msra.mxu0 %v1810
    %1886 = vmatpush.bf16.msra.mxu0 %v1806
    %1887 = vmatpush.bf16.msra.mxu0 %v1802
    %1888 = vmatpush.bf16.msra.mxu0 %v1798
    %1889 = vmatpush.bf16.msra.mxu0 %v1794
    %1890 = vmatpush.bf16.msra.mxu0 %v1790
    %1891 = vmatpush.bf16.msra.mxu0 %v1786
    %1892 = vmatpush.bf16.msra.mxu0 %v1782
    %1893 = vmatmul.bf16.gmra.mxu0 %v1649
    %v1894 = vpop.f32.mrf.mxu0
    %v1895 = vadd.f32 0.0, %v1894
    %v1896 = vpop.f32.mrf.mxu0
    %v1897 = vadd.f32 0.0, %v1896
    %1898 = vdwg.mxu0
    %v1899 = vxor.u32 %v1853, 2147483648
    %v1900 = vxor.u32 %v1867, 2147483648
    %v1901 = vxor.u32 %v1855, 2147483648
    %v1902 = vxor.u32 %v1869, 2147483648
    %v1903 = vmul.f32 %v1899, 1.442695
    %v1904 = vpow.pop %v1903
    %v1905 = vmul.f32 %v1900, 1.442695
    %v1906 = vpow.pop %v1905
    %v1907 = vmul.f32 %v1901, 1.442695
    %v1908 = vpow.pop %v1907
    %v1909 = vmul.f32 %v1902, 1.442695
    %v1910 = vpow.pop %v1909
    %v1911 = vadd.f32 %v1904, 1.0
    %v1912 = vadd.f32 %v1906, 1.0
    %v1913 = vadd.f32 %v1908, 1.0
    %v1914 = vadd.f32 %v1910, 1.0
    %v1915 = vrcp.pop %v1911
    %v1916 = vmul.f32 %v1911, %v1915
    %v1917 = vsub.f32 1.0, %v1916
    %v1918 = vmul.f32 %v1915, %v1917
    %v1919 = vadd.f32 %v1915, %v1918
    %vm1920 = vweird.f32 %v1911
    %vm1921 = vweird.f32 %v1915
    %vm1922 = vmor %vm1920, %vm1921
    %v1923 = vsel %vm1922, %v1915, %v1919
    %v1924 = vand.u32 2147483647, %v1911
    %vm1925 = vcmp.eq.f32.partialorder %v1924, 8.507059e+37
    %v1926 = vand.u32 %v1911, 2147483648
    %v1927 = vor.u32 1.1754944e-38, %v1926
    %v1928 = vsel %vm1925, %v1927, %v1923
    %v1929 = vmul.f32 1.0, %v1928
    %v1930 = vrcp.pop %v1912
    %v1931 = vmul.f32 %v1912, %v1930
    %v1932 = vsub.f32 1.0, %v1931
    %v1933 = vmul.f32 %v1930, %v1932
    %v1934 = vadd.f32 %v1930, %v1933
    %vm1935 = vweird.f32 %v1912
    %vm1936 = vweird.f32 %v1930
    %vm1937 = vmor %vm1935, %vm1936
    %v1938 = vsel %vm1937, %v1930, %v1934
    %v1939 = vand.u32 2147483647, %v1912
    %vm1940 = vcmp.eq.f32.partialorder %v1939, 8.507059e+37
    %v1941 = vand.u32 %v1912, 2147483648
    %v1942 = vor.u32 1.1754944e-38, %v1941
    %v1943 = vsel %vm1940, %v1942, %v1938
    %v1944 = vmul.f32 1.0, %v1943
    %v1945 = vrcp.pop %v1913
    %v1946 = vmul.f32 %v1913, %v1945
    %v1947 = vsub.f32 1.0, %v1946
    %v1948 = vmul.f32 %v1945, %v1947
    %v1949 = vadd.f32 %v1945, %v1948
    %vm1950 = vweird.f32 %v1913
    %vm1951 = vweird.f32 %v1945
    %vm1952 = vmor %vm1950, %vm1951
    %v1953 = vsel %vm1952, %v1945, %v1949
    %v1954 = vand.u32 2147483647, %v1913
    %vm1955 = vcmp.eq.f32.partialorder %v1954, 8.507059e+37
    %v1956 = vand.u32 %v1913, 2147483648
    %v1957 = vor.u32 1.1754944e-38, %v1956
    %v1958 = vsel %vm1955, %v1957, %v1953
    %v1959 = vmul.f32 1.0, %v1958
    %v1960 = vrcp.pop %v1914
    %v1961 = vmul.f32 %v1914, %v1960
    %v1962 = vsub.f32 1.0, %v1961
    %v1963 = vmul.f32 %v1960, %v1962
    %v1964 = vadd.f32 %v1960, %v1963
    %vm1965 = vweird.f32 %v1914
    %vm1966 = vweird.f32 %v1960
    %vm1967 = vmor %vm1965, %vm1966
    %v1968 = vsel %vm1967, %v1960, %v1964
    %v1969 = vand.u32 2147483647, %v1914
    %vm1970 = vcmp.eq.f32.partialorder %v1969, 8.507059e+37
    %v1971 = vand.u32 %v1914, 2147483648
    %v1972 = vor.u32 1.1754944e-38, %v1971
    %v1973 = vsel %vm1970, %v1972, %v1968
    %v1974 = vmul.f32 1.0, %v1973
    %v1975 = vmul.f32 %v1853, %v1929
    %v1976 = vmul.f32 %v1867, %v1944
    %v1977 = vmul.f32 %v1855, %v1959
    %v1978 = vmul.f32 %v1869, %v1974
    %v1979 = vmul.f32 %v1975, %v1881
    %v1980 = vmul.f32 %v1976, %v1895
    %v1981 = vmul.f32 %v1977, %v1883
    %v1982 = vmul.f32 %v1978, %v1897
    %v1983 = vpack.c.bf16 %v1981, %v1979
    %v1984 = vpack.c.bf16 %v1982, %v1980
    %s1985 = scalar_lea.vmem [#allocation12], 128
    %v1986 = vld [vmem:[%s1985] sm:$0xf]
    %v1987 = vld [vmem:[%s1985 + $0x4] sm:$0xf]
    %v1988 = vld [vmem:[%s1985 + $0x8] sm:$0xf]
    %v1989 = vld [vmem:[%s1985 + $0xc] sm:$0xf]
    %v1990 = vld [vmem:[%s1985 + $0x10] sm:$0xf]
    %v1991 = vld [vmem:[%s1985 + $0x14] sm:$0xf]
    %v1992 = vld [vmem:[%s1985 + $0x18] sm:$0xf]
    %v1993 = vld [vmem:[%s1985 + $0x1c] sm:$0xf]
    %v1994 = vld [vmem:[%s1985 + $0x20] sm:$0xf]
    %v1995 = vld [vmem:[%s1985 + $0x24] sm:$0xf]
    %v1996 = vld [vmem:[%s1985 + $0x28] sm:$0xf]
    %v1997 = vld [vmem:[%s1985 + $0x2c] sm:$0xf]
    %v1998 = vld [vmem:[%s1985 + $0x30] sm:$0xf]
    %v1999 = vld [vmem:[%s1985 + $0x34] sm:$0xf]
    %v2000 = vld [vmem:[%s1985 + $0x38] sm:$0xf]
    %v2001 = vld [vmem:[%s1985 + $0x3c] sm:$0xf]
    %v2002 = vld [vmem:[%s1985 + $0x40] sm:$0xf]
    %v2003 = vld [vmem:[%s1985 + $0x44] sm:$0xf]
    %v2004 = vld [vmem:[%s1985 + $0x48] sm:$0xf]
    %v2005 = vld [vmem:[%s1985 + $0x4c] sm:$0xf]
    %v2006 = vld [vmem:[%s1985 + $0x50] sm:$0xf]
    %v2007 = vld [vmem:[%s1985 + $0x54] sm:$0xf]
    %v2008 = vld [vmem:[%s1985 + $0x58] sm:$0xf]
    %v2009 = vld [vmem:[%s1985 + $0x5c] sm:$0xf]
    %v2010 = vld [vmem:[%s1985 + $0x60] sm:$0xf]
    %v2011 = vld [vmem:[%s1985 + $0x64] sm:$0xf]
    %v2012 = vld [vmem:[%s1985 + $0x68] sm:$0xf]
    %v2013 = vld [vmem:[%s1985 + $0x6c] sm:$0xf]
    %v2014 = vld [vmem:[%s1985 + $0x70] sm:$0xf]
    %v2015 = vld [vmem:[%s1985 + $0x74] sm:$0xf]
    %v2016 = vld [vmem:[%s1985 + $0x78] sm:$0xf]
    %v2017 = vld [vmem:[%s1985 + $0x7c] sm:$0xf]
    %v2050 = vunpack.c.l.b16 %v1986
    %v2051 = vunpack.c.l.b16 %v1987
    %v2052 = vunpack.c.l.b16 %v1988
    %v2053 = vunpack.c.l.b16 %v1989
    %v2054 = vunpack.c.l.b16 %v1990
    %v2055 = vunpack.c.l.b16 %v1991
    %v2056 = vunpack.c.l.b16 %v1992
    %v2057 = vunpack.c.l.b16 %v1993
    %v2058 = vunpack.c.l.b16 %v1994
    %v2059 = vunpack.c.l.b16 %v1995
    %v2060 = vunpack.c.l.b16 %v1996
    %v2061 = vunpack.c.l.b16 %v1997
    %v2062 = vunpack.c.l.b16 %v1998
    %v2063 = vunpack.c.l.b16 %v1999
    %v2064 = vunpack.c.l.b16 %v2000
    %v2065 = vunpack.c.l.b16 %v2001
    %v2066 = vunpack.c.l.b16 %v2002
    %v2067 = vunpack.c.l.b16 %v2003
    %v2068 = vunpack.c.l.b16 %v2004
    %v2069 = vunpack.c.l.b16 %v2005
    %v2070 = vunpack.c.l.b16 %v2006
    %v2071 = vunpack.c.l.b16 %v2007
    %v2072 = vunpack.c.l.b16 %v2008
    %v2073 = vunpack.c.l.b16 %v2009
    %v2074 = vunpack.c.l.b16 %v2010
    %v2075 = vunpack.c.l.b16 %v2011
    %v2076 = vunpack.c.l.b16 %v2012
    %v2077 = vunpack.c.l.b16 %v2013
    %v2078 = vunpack.c.l.b16 %v2014
    %v2079 = vunpack.c.l.b16 %v2015
    %v2080 = vunpack.c.l.b16 %v2016
    %v2081 = vunpack.c.l.b16 %v2017
    %v2082 = vpack.c.b16 %v2051, %v2050
    %v2083 = vpack.c.b16 %v2053, %v2052
    %v2084 = vpack.c.b16 %v2055, %v2054
    %v2085 = vpack.c.b16 %v2057, %v2056
    %v2086 = vpack.c.b16 %v2059, %v2058
    %v2087 = vpack.c.b16 %v2061, %v2060
    %v2088 = vpack.c.b16 %v2063, %v2062
    %v2089 = vpack.c.b16 %v2065, %v2064
    %v2090 = vpack.c.b16 %v2067, %v2066
    %v2091 = vpack.c.b16 %v2069, %v2068
    %v2092 = vpack.c.b16 %v2071, %v2070
    %v2093 = vpack.c.b16 %v2073, %v2072
    %v2094 = vpack.c.b16 %v2075, %v2074
    %v2095 = vpack.c.b16 %v2077, %v2076
    %v2096 = vpack.c.b16 %v2079, %v2078
    %v2097 = vpack.c.b16 %v2081, %v2080
    %2114 = vmatpush.bf16.msra.mxu0 %v2089
    %2115 = vmatpush.bf16.msra.mxu0 %v2088
    %2116 = vmatpush.bf16.msra.mxu0 %v2087
    %2117 = vmatpush.bf16.msra.mxu0 %v2086
    %2118 = vmatpush.bf16.msra.mxu0 %v2085
    %2119 = vmatpush.bf16.msra.mxu0 %v2084
    %2120 = vmatpush.bf16.msra.mxu0 %v2083
    %2121 = vmatpush.bf16.msra.mxu0 %v2082
    %2122 = vmatmul.bf16.gmra.mxu0 %v1983
    %v2123 = vpop.f32.mrf.mxu0
    %v2124 = vadd.f32 0.0, %v2123
    %v2125 = vpop.f32.mrf.mxu0
    %v2126 = vadd.f32 0.0, %v2125
    %2127 = vdwg.mxu0
    %2128 = vmatpush.bf16.msra.mxu0 %v2097
    %2129 = vmatpush.bf16.msra.mxu0 %v2096
    %2130 = vmatpush.bf16.msra.mxu0 %v2095
    %2131 = vmatpush.bf16.msra.mxu0 %v2094
    %2132 = vmatpush.bf16.msra.mxu0 %v2093
    %2133 = vmatpush.bf16.msra.mxu0 %v2092
    %2134 = vmatpush.bf16.msra.mxu0 %v2091
    %2135 = vmatpush.bf16.msra.mxu0 %v2090
    %2136 = vmatmul.bf16.gmra.mxu0 %v1984
    %v2137 = vpop.f32.mrf.mxu0
    %v2138 = vadd.f32 %v2124, %v2137
    %v2139 = vpop.f32.mrf.mxu0
    %v2140 = vadd.f32 %v2126, %v2139
    %2141 = vdwg.mxu0
    %v2142 = vadd.f32 %v1608, %v2138
    %v2143 = vadd.f32 %v1609, %v2140
    %v2144 = vld [vmem:[%s9] sm:$0x1]
    %v2145 = vmul.f32 %v2142, %v2142
    %v2146 = vmul.f32 %v2143, %v2143
    %2147 = vadd.xlane.f32.xlu0 %v2145
    %v2148 = vpop.xlane.xlu0 %2147
    %2149 = vadd.xlane.f32.xlu0 %v2146
    %v2150 = vpop.xlane.xlu0 %2149
    %v2151 = vmul.f32 %v2148, %v166
    %v2152 = vmul.f32 %v2150, %v166
    %v2153 = vadd.f32 %v2151, 1e-06
    %v2154 = vadd.f32 %v2152, 1e-06
    %v2155 = vrsqrt.pop %v2153
    %v2156 = vmul.f32 %v2155, %v2153
    %v2157 = vmul.f32 %v2156, %v2155
    %v2158 = vmul.f32 0.5, %v2157
    %v2159 = vsub.f32 1.5, %v2158
    %v2160 = vmul.f32 %v2155, %v2159
    %vm2161 = vweird.f32 %v2153
    %vm2162 = vweird.f32 %v2155
    %vm2163 = vmor %vm2161, %vm2162
    %v2164 = vsel %vm2163, %v2155, %v2160
    %v2165 = vrsqrt.pop %v2154
    %v2166 = vmul.f32 %v2165, %v2154
    %v2167 = vmul.f32 %v2166, %v2165
    %v2168 = vmul.f32 0.5, %v2167
    %v2169 = vsub.f32 1.5, %v2168
    %v2170 = vmul.f32 %v2165, %v2169
    %vm2171 = vweird.f32 %v2154
    %vm2172 = vweird.f32 %v2165
    %vm2173 = vmor %vm2171, %vm2172
    %v2174 = vsel %vm2173, %v2165, %v2170
    %v2175 = vmul.f32 %v2142, %v2164
    %v2176 = vmul.f32 %v2143, %v2174
    %v2178 = vperm.slane %v2144, 0
    %v2180 = vmul.f32 %v2175, %v2178
    %v2181 = vmul.f32 %v2176, %v2178
    %v2182 = vpack.c.bf16 %v2181, %v2180
    %v2183 = vld [vmem:[#allocation14] sm:$0xff]
    %v2184 = vld [vmem:[#allocation14 + $0x8] sm:$0xff]
    %v2185 = vld [vmem:[#allocation14 + $0x10] sm:$0xff]
    %v2186 = vld [vmem:[#allocation14 + $0x18] sm:$0xff]
    %v2187 = vld [vmem:[#allocation14 + $0x20] sm:$0xff]
    %v2188 = vld [vmem:[#allocation14 + $0x28] sm:$0xff]
    %v2189 = vld [vmem:[#allocation14 + $0x30] sm:$0xff]
    %v2190 = vld [vmem:[#allocation14 + $0x38] sm:$0xff]
    %v2191 = vld [vmem:[#allocation14 + $0x40] sm:$0xff]
    %v2192 = vld [vmem:[#allocation14 + $0x48] sm:$0xff]
    %v2193 = vld [vmem:[#allocation14 + $0x50] sm:$0xff]
    %v2194 = vld [vmem:[#allocation14 + $0x58] sm:$0xff]
    %v2195 = vld [vmem:[#allocation14 + $0x60] sm:$0xff]
    %v2196 = vld [vmem:[#allocation14 + $0x68] sm:$0xff]
    %v2197 = vld [vmem:[#allocation14 + $0x70] sm:$0xff]
    %v2198 = vld [vmem:[#allocation14 + $0x78] sm:$0xff]
    %v2215 = vunpack.c.l.b16 %v2183
    %v2216 = vunpack.c.h.b16 %v2183
    %v2217 = vunpack.c.l.b16 %v2184
    %v2218 = vunpack.c.h.b16 %v2184
    %v2219 = vunpack.c.l.b16 %v2185
    %v2220 = vunpack.c.h.b16 %v2185
    %v2221 = vunpack.c.l.b16 %v2186
    %v2222 = vunpack.c.h.b16 %v2186
    %v2223 = vunpack.c.l.b16 %v2187
    %v2224 = vunpack.c.h.b16 %v2187
    %v2225 = vunpack.c.l.b16 %v2188
    %v2226 = vunpack.c.h.b16 %v2188
    %v2227 = vunpack.c.l.b16 %v2189
    %v2228 = vunpack.c.h.b16 %v2189
    %v2229 = vunpack.c.l.b16 %v2190
    %v2230 = vunpack.c.h.b16 %v2190
    %v2231 = vunpack.c.l.b16 %v2191
    %v2232 = vunpack.c.h.b16 %v2191
    %v2233 = vunpack.c.l.b16 %v2192
    %v2234 = vunpack.c.h.b16 %v2192
    %v2235 = vunpack.c.l.b16 %v2193
    %v2236 = vunpack.c.h.b16 %v2193
    %v2237 = vunpack.c.l.b16 %v2194
    %v2238 = vunpack.c.h.b16 %v2194
    %v2239 = vunpack.c.l.b16 %v2195
    %v2240 = vunpack.c.h.b16 %v2195
    %v2241 = vunpack.c.l.b16 %v2196
    %v2242 = vunpack.c.h.b16 %v2196
    %v2243 = vunpack.c.l.b16 %v2197
    %v2244 = vunpack.c.h.b16 %v2197
    %v2245 = vunpack.c.l.b16 %v2198
    %v2246 = vunpack.c.h.b16 %v2198
    %v2247 = vpack.c.b16 %v2217, %v2215
    %v2248 = vpack.c.b16 %v2218, %v2216
    %v2249 = vpack.c.b16 %v2221, %v2219
    %v2250 = vpack.c.b16 %v2222, %v2220
    %v2251 = vpack.c.b16 %v2225, %v2223
    %v2252 = vpack.c.b16 %v2226, %v2224
    %v2253 = vpack.c.b16 %v2229, %v2227
    %v2254 = vpack.c.b16 %v2230, %v2228
    %v2255 = vpack.c.b16 %v2233, %v2231
    %v2256 = vpack.c.b16 %v2234, %v2232
    %v2257 = vpack.c.b16 %v2237, %v2235
    %v2258 = vpack.c.b16 %v2238, %v2236
    %v2259 = vpack.c.b16 %v2241, %v2239
    %v2260 = vpack.c.b16 %v2242, %v2240
    %v2261 = vpack.c.b16 %v2245, %v2243
    %v2262 = vpack.c.b16 %v2246, %v2244
    %2279 = vmatpush.bf16.msra.mxu0 %v2261
    %2280 = vmatpush.bf16.msra.mxu0 %v2259
    %2281 = vmatpush.bf16.msra.mxu0 %v2257
    %2282 = vmatpush.bf16.msra.mxu0 %v2255
    %2283 = vmatpush.bf16.msra.mxu0 %v2253
    %2284 = vmatpush.bf16.msra.mxu0 %v2251
    %2285 = vmatpush.bf16.msra.mxu0 %v2249
    %2286 = vmatpush.bf16.msra.mxu0 %v2247
    %2287 = vmatmul.bf16.gmra.mxu0 %v2182
    %v2288 = vpop.f32.mrf.mxu0
    %v2289 = vadd.f32 0.0, %v2288
    %v2290 = vpop.f32.mrf.mxu0
    %v2291 = vadd.f32 0.0, %v2290
    %2292 = vdwg.mxu0
    %2293 = vmatpush.bf16.msra.mxu0 %v2262
    %2294 = vmatpush.bf16.msra.mxu0 %v2260
    %2295 = vmatpush.bf16.msra.mxu0 %v2258
    %2296 = vmatpush.bf16.msra.mxu0 %v2256
    %2297 = vmatpush.bf16.msra.mxu0 %v2254
    %2298 = vmatpush.bf16.msra.mxu0 %v2252
    %2299 = vmatpush.bf16.msra.mxu0 %v2250
    %2300 = vmatpush.bf16.msra.mxu0 %v2248
    %2301 = vmatmul.bf16.gmra.mxu0 %v2182
    %v2302 = vpop.f32.mrf.mxu0
    %v2303 = vadd.f32 0.0, %v2302
    %v2304 = vpop.f32.mrf.mxu0
    %v2305 = vadd.f32 0.0, %v2304
    %2306 = vdwg.mxu0
    %2307 = vst [vmem:[#allocation15] sm:$0xff] %v2289
    %2308 = vst [vmem:[#allocation15 + $0x8] sm:$0xff] %v2303
    %2309 = vst [vmem:[#allocation15 + $0x10] sm:$0xff] %v2291
    %2310 = vst [vmem:[#allocation15 + $0x18] sm:$0xff] %v2305
    %v2311 = vmax.f32 %v2289, %v2303
    %2312 = vmax.xlane.f32.xlu0 %v2311
    %v2313 = vpop.xlane.xlu0 %2312
    %v2314 = vmax.f32 %v2291, %v2305
    %2315 = vmax.xlane.f32.xlu0 %v2314
    %v2316 = vpop.xlane.xlu0 %2315
    %v2317 = vsub.f32 %v2289, %v2313
    %v2318 = vsub.f32 %v2303, %v2313
    %v2319 = vsub.f32 %v2291, %v2316
    %v2320 = vsub.f32 %v2305, %v2316
    %v2321 = vmul.f32 %v2317, 1.442695
    %v2322 = vpow.pop %v2321
    %v2323 = vmul.f32 %v2318, 1.442695
    %v2324 = vpow.pop %v2323
    %v2325 = vmul.f32 %v2319, 1.442695
    %v2326 = vpow.pop %v2325
    %v2327 = vmul.f32 %v2320, 1.442695
    %v2328 = vpow.pop %v2327
    %v2329 = vadd.f32 %v2322, %v2324
    %2330 = vadd.xlane.f32.xlu0 %v2329
    %v2331 = vpop.xlane.xlu0 %2330
    %v2332 = vadd.f32 %v2326, %v2328
    %2333 = vadd.xlane.f32.xlu0 %v2332
    %v2334 = vpop.xlane.xlu0 %2333
    %v2335 = vlog2.pop %v2331
    %v2336 = vmul.f32 %v2335, 0.6931472
    %v2337 = vlog2.pop %v2334
    %v2338 = vmul.f32 %v2337, 0.6931472
    %v2339 = vadd.f32 %v2313, %v2336
    %v2340 = vadd.f32 %v2316, %v2338
    %v2341 = vld [vmem:[%s2] sm:$0xff]
    %v2342 = vld [vmem:[%s2 + $0x8] sm:$0xff]
    %vm2343 = vcmp.ne.s32.totalorder %v2341, 4294967196
    %vm2344 = vcmp.ne.s32.totalorder %v2342, 4294967196
    %v2345 = vlaneseq
    %v2346 = vand.u32 %v2345, 127
    %v2347 = vadd.s32 %v2346, 128
    %2348 = vset.pattern.permute.xlu0 0
    %2349 = vperm.xlu0 %2348, %v2341
    %v2350 = vpop.permute.xlu0 %2349
    %2351 = vset.pattern.permute.xlu0 0
    %2352 = vperm.xlu0 %2351, %v2342
    %v2353 = vpop.permute.xlu0 %2352
    %vm2354 = vcmp.eq.s32.totalorder %v2350, %v2346
    %vm2355 = vcmp.eq.s32.totalorder %v2350, %v2347
    %vm2356 = vcmp.eq.s32.totalorder %v2353, %v2346
    %vm2357 = vcmp.eq.s32.totalorder %v2353, %v2347
    %v2358 = vsel %vm2354, %v2289, 0.0
    %v2359 = vsel %vm2355, %v2303, 0.0
    %v2360 = vsel %vm2356, %v2291, 0.0
    %v2361 = vsel %vm2357, %v2305, 0.0
    %v2362 = vadd.f32 %v2358, %v2359
    %2363 = vadd.xlane.f32.xlu0 %v2362
    %v2364 = vpop.xlane.xlu0 %2363
    %v2365 = vadd.f32 %v2360, %v2361
    %2366 = vadd.xlane.f32.xlu0 %v2365
    %v2367 = vpop.xlane.xlu0 %2366
    %v2368 = vsub.f32 %v2339, %v2364
    %v2369 = vsub.f32 %v2340, %v2367
    %v2370 = vsel %vm2343, %v2368, 0.0
    %v2371 = vsel %vm2344, %v2369, 0.0
    %vm2372 = vcmask 7168
    %v2373 = vsel %vm2372, %v2370, 0.0
    %v2374 = vsel %vm2372, %v2371, 0.0
    %v2375 = vadd.f32 %v2373, %v2374
    %2376 = vadd.xlane.f32.xlu0 %v2375
    %v2377 = vpop.xlane.xlu0 %2376
    %v2378 = vrot.slane %v2377, 4
    %v2379 = vadd.f32 %v2377, %v2378
    %v2380 = vrot.slane %v2379, 2
    %v2381 = vadd.f32 %v2379, %v2380
    %v2382 = vrot.slane %v2381, 1
    %v2383 = vadd.f32 %v2381, %v2382
    %s2384 = vtos %v2383
    %v2385 = vsel %vm2343, 1, 0
    %v2386 = vsel %vm2344, 1, 0
    %v2387 = vcvt.s32.f32 %v2385
    %v2388 = vcvt.s32.f32 %v2386
    %v2389 = vsel %vm2372, %v2387, 0.0
    %v2390 = vsel %vm2372, %v2388, 0.0
    %v2391 = vadd.f32 %v2389, %v2390
    %2392 = vadd.xlane.f32.xlu0 %v2391
    %v2393 = vpop.xlane.xlu0 %2392
    %v2394 = vrot.slane %v2393, 4
    %v2395 = vadd.f32 %v2393, %v2394
    %v2396 = vrot.slane %v2395, 2
    %v2397 = vadd.f32 %v2395, %v2396
    %v2398 = vrot.slane %v2397, 1
    %v2399 = vadd.f32 %v2397, %v2398
    %s2400 = vtos %v2399
    %s2401 = smax.f32 %s2400, 1.0
    %v2402 = vstv %s2401
    %v2403 = vrcp.pop %v2402
    %v2404 = vmul.f32 %v2402, %v2403
    %v2405 = vsub.f32 1.0, %v2404
    %v2406 = vmul.f32 %v2403, %v2405
    %v2407 = vadd.f32 %v2403, %v2406
    %vm2408 = vweird.f32 %v2402
    %vm2409 = vweird.f32 %v2403
    %vm2410 = vmor %vm2408, %vm2409
    %v2411 = vsel %vm2410, %v2403, %v2407
    %v2412 = vand.u32 2147483647, %v2402
    %vm2413 = vcmp.eq.f32.partialorder %v2412, 8.507059e+37
    %v2414 = vand.u32 %v2402, 2147483648
    %v2415 = vor.u32 1.1754944e-38, %v2414
    %v2416 = vsel %vm2413, %v2415, %v2411
    %s2417 = vtos %v2416
    %s2418 = smul.f32 %s2384, %s2417
    %s2419 = scalar_lea.smem [#allocation16], 0
    %2420 = sst [smem:[%s2419]] %s2418
    // Predicated region
    $region74: #{tpu_custom_call.1} parent=1 // pred_check
      _
    $region75: #{tpu_custom_call.1} parent=1 // pred_check_branch
      %2422 = sbr.rel (0) target = $region77
    $region76: #{tpu_custom_call.1} parent=1 // pred_region
      %2424 = vsyncadd [#allocation4], 0
      %s2425 = sshll.u32 [#allocation15], 4
      %s2426 = int_to_ptr.vmem [resolvable:$true] %s2425
      %s2427 = sshll.u32 %s11, 4
      %s2428 = int_to_ptr.hbm [resolvable:$true] %s2427
      %2433 = dma.vmem_to_hbm [thread:$0]  %s2426, 512, %s2428, [#allocation4], 256, 256, 16
    $region77: #{tpu_custom_call.1} parent=1 // pred_fallthru
      _
    // Predicated region
    $region78: #{tpu_custom_call.1} parent=1 // pred_check
      _
    $region79: #{tpu_custom_call.1} parent=1 // pred_check_branch
      %2435 = sbr.rel (0) target = $region81
    $region80: #{tpu_custom_call.1} parent=1 // pred_region
      %2437 = vsyncadd [#allocation5], 0
      %s2439 = sshll.u32 %s12, 4
      %s2440 = int_to_ptr.hbm [resolvable:$true] %s2439
      %2442 = dma.smem_to_hbm [#allocation16], 16, %s2440, [#allocation5]
    $region81: #{tpu_custom_call.1} parent=1 // pred_fallthru
      _
    // Predicated region
    $region82: #{tpu_custom_call.1} parent=1 // pred_check
      _
    $region83: #{tpu_custom_call.1} parent=1 // pred_check_branch
      %2444 = sbr.rel (0) target = $region85
    $region84: #{tpu_custom_call.1} parent=1 // pred_region
      %2446 = dma.done [#allocation4], 512
    $region85: #{tpu_custom_call.1} parent=1 // pred_fallthru
      _
    // Predicated region
    $region86: #{tpu_custom_call.1} parent=1 // pred_check
      _
    $region87: #{tpu_custom_call.1} parent=1 // pred_check_branch
      %2448 = sbr.rel (0) target = $region89
    $region88: #{tpu_custom_call.1} parent=1 // pred_region
      %2450 = dma.done [#allocation5], 16
    $region89: #{tpu_custom_call.1} parent=1 // pred_fallthru
      _
    %2451 = sfence
    %2452 = vsyncpa [#allocation3], 1
    %2453 = vsyncpa [#allocation7], 1
    %2454 = vsyncpa [#allocation10], 1
    %2455 = vsyncpa [#allocation13], 1
    %2456 = vsyncpa [#allocation4], 1
    %2457 = vsyncpa [#allocation5], 1

</llo_original>
